<compile_context>
chip_gen: v6e
topology: v6e:2x2x1
jax: 0.10.0
libtpu: 0.0.40
codegen_flags: <defaults>
</compile_context>

<pallas_src>
import jax
import jax.numpy as jnp
from jax.experimental import pallas as pl
from jax.experimental.pallas import tpu as pltpu

FILTER_SIZES = (1, 2, 3, 5)
_NEG = jnp.float32(-1e30)   # finite "minus infinity" for the max-pool fold


def _round_up(x, m):
    return (x + m - 1) // m * m


def _choose_batch_tile(B, requested):
    """Multiple-of-8 batch tile; keep >= 2 grid steps when the batch allows it
    so the "parallel" batch axis can split across v7x's two TensorCores."""
    B8 = _round_up(max(int(B), 1), 8)
    bt = _round_up(max(min(int(requested), B8), 8), 8)
    if B8 >= 16:
        bt = min(bt, max((B8 // 2) // 8 * 8, 8))
    return bt


def cnn_target_kernel(emb_ref, w_conv_ref, bias_mask_ref,
                      w_head_ref, b_head_ref, out_ref):
    emb = emb_ref[...]                               # (BT, L_buf, E) bf16
    BT, _, E = emb.shape
    max_fs, _, NF_pad = w_conv_ref.shape
    L_out = bias_mask_ref.shape[0]

    # Fused conv over all filter sizes: one (BT*L_out, E) @ (E, NF_pad) matmul
    # per tap, accumulated in f32.  Taps beyond a filter's size have zero
    # weights (padded in the wrapper), so every channel group is correct.
    acc = jnp.dot(emb[:, 0:L_out, :].reshape(BT * L_out, E),
                  w_conv_ref[0],
                  preferred_element_type=jnp.float32)
    for k in range(1, max_fs):                       # static unroll over taps
        acc = acc + jnp.dot(
            emb[:, k:k + L_out, :].reshape(BT * L_out, E),
            w_conv_ref[k],
            preferred_element_type=jnp.float32)

    # bias_mask = bias + (-1e30)*(1 - valid): invalid / padded positions never
    # win the max; ReLU is applied only to the pooled (BT, NF_pad) result.
    conv = acc.reshape(BT, L_out, NF_pad) + bias_mask_ref[...][None, :, :]
    pooled = jnp.maximum(jnp.max(conv, axis=1), 0.0)          # (BT, NF_pad)

    # Fused MSE + CE heads, kept in f32 (tiny matmul, tighter MSE accuracy).
    head = jnp.dot(pooled, w_head_ref[...],
                   preferred_element_type=jnp.float32)
    out_ref[...] = head + b_head_ref[...]


def _build_kernel_params(weights, num_filters, embed_size, n_classes,
                         filter_sizes, NF_pad, H_pad, L, L_out):
    F_ = num_filters
    nfs = len(filter_sizes)
    max_fs = max(filter_sizes)

    w_conv = jnp.zeros((max_fs, embed_size, NF_pad), jnp.float32)
    # Padded channels (beyond 4F) stay at -1e30 everywhere -> pooled ReLU -> 0,
    # and their head weights are zero, so they contribute nothing.
    bias_mask = jnp.full((L_out, NF_pad), _NEG, jnp.float32)
    pos = jnp.arange(L_out)

    for i, fs in enumerate(filter_sizes):
        w = weights[f'conv{i}_weights'].reshape(F_, 1, fs, embed_size)  # torch
        w = jnp.transpose(w[:, 0, :, :], (1, 2, 0))                     # (fs,E,F)
        w_conv = w_conv.at[:fs, :, i * F_:(i + 1) * F_].set(w)
        b = weights[f'conv{i}_bias']                                    # (F,)
        valid = (pos <= (L - fs)).astype(jnp.float32)                   # (L_out,)
        col = b[None, :] + _NEG * (1.0 - valid)[:, None]                # (L_out,F)
        bias_mask = bias_mask.at[:, i * F_:(i + 1) * F_].set(col)

    w_head = jnp.zeros((NF_pad, H_pad), jnp.float32)
    b_head = jnp.zeros((1, H_pad), jnp.float32)
    w_mse = weights['MSE_weights'].reshape(1, nfs * F_)                 # (1, 4F)
    w_ce = weights['CE_weights'].reshape(n_classes, nfs * F_)           # (C, 4F)
    w_head = w_head.at[:nfs * F_, 0:1].set(w_mse.T)
    w_head = w_head.at[:nfs * F_, 1:1 + n_classes].set(w_ce.T)
    b_head = b_head.at[0, 0:1].set(weights['MSE_bias'])
    b_head = b_head.at[0, 1:1 + n_classes].set(weights['CE_bias'])

    return w_conv.astype(jnp.bfloat16), bias_mask, w_head, b_head


def cnn_target_forward(x_ids, embedding_matrix, weights,
                       num_filters, embed_size, n_classes,
                       filter_sizes=FILTER_SIZES, batch_tile=128):
    B, L = x_ids.shape
    E = embedding_matrix.shape[1]
    assert E == embed_size
    max_fs = max(filter_sizes)

    NF_pad = _round_up(len(filter_sizes) * num_filters, 128)
    H_pad = _round_up(1 + n_classes, 128)
    # L_out rounded to 16 keeps the bf16 (16,128) sublane packing aligned for
    # the per-tap reshape; L_buf only needs to cover the last tap.
    L_out = _round_up(L, 16)                     # conv positions computed
    L_buf = _round_up(L_out + max_fs - 1, 8)     # padded sequence buffer

    bt = _choose_batch_tile(B, batch_tile)
    B_pad = _round_up(_round_up(B, 8), bt)
    grid = (B_pad // bt,)

    # --- JAX glue: embedding gather + padding (native E, no lane padding) ---
    # TODO(synk): move this gather in-kernel to remove the (B, L, E) HBM trip.
    emb = jnp.take(embedding_matrix.astype(jnp.float32), x_ids, axis=0)
    emb = jnp.pad(emb, ((0, B_pad - B), (0, L_buf - L), (0, 0)))
    emb = emb.astype(jnp.bfloat16)                               # (B_pad,L_buf,E)

    w_conv, bias_mask, w_head, b_head = _build_kernel_params(
        weights, num_filters, embed_size, n_classes, filter_sizes,
        NF_pad, H_pad, L, L_out)

    # VMEM budget derived from the tile (double-buffered IO + resident weights
    # + f32 intermediates, 2x margin), clamped to 64 MiB so v7x never over-asks.
    emb_tile_b = bt * L_buf * E * 2
    out_tile_b = bt * H_pad * 4
    const_b = (max_fs * E * NF_pad * 2 + L_out * NF_pad * 4
               + NF_pad * H_pad * 4 + H_pad * 4)
    interm_b = 2 * bt * L_out * NF_pad * 4
    working = 2 * (emb_tile_b + out_tile_b) + 2 * const_b + interm_b
    vmem_limit = int(min(64 * 1024 * 1024,
                         max(32 * 1024 * 1024, 2 * working)))

    out = pl.pallas_call(
        cnn_target_kernel,
        out_shape=jax.ShapeDtypeStruct((B_pad, H_pad), jnp.float32),
        grid=grid,
        in_specs=[
            pl.BlockSpec((bt, L_buf, E), lambda i: (i, 0, 0)),
            pl.BlockSpec((max_fs, E, NF_pad), lambda i: (0, 0, 0)),
            pl.BlockSpec((L_out, NF_pad), lambda i: (0, 0)),
            pl.BlockSpec((NF_pad, H_pad), lambda i: (0, 0)),
            pl.BlockSpec((1, H_pad), lambda i: (0, 0)),
        ],
        out_specs=pl.BlockSpec((bt, H_pad), lambda i: (i, 0)),
        compiler_params=pltpu.CompilerParams(
            dimension_semantics=("parallel",),
            vmem_limit_bytes=vmem_limit),
    )(emb, w_conv, bias_mask, w_head, b_head)

    logit_mse = out[:B, 0:1]
    logit_ce = out[:B, 1:1 + n_classes]
    return [logit_mse, logit_ce]


def reference_forward(x_ids, embedding_matrix, weights,
                      num_filters, embed_size, n_classes,
                      filter_sizes=FILTER_SIZES):
    """Pure-JAX f32 reference mirroring the PyTorch forward (verification)."""
    emb = jnp.take(embedding_matrix, x_ids, axis=0)
    x = emb[:, None, :, :]                                      # (B,1,L,E) NCHW
    feats = []
    for i, fs in enumerate(filter_sizes):
        w = weights[f'conv{i}_weights'].reshape(num_filters, 1, fs, embed_size)
        b = weights[f'conv{i}_bias']
        conv = jax.lax.conv_general_dilated(
            x, w, window_strides=(1, 1), padding='VALID',
            dimension_numbers=('NCHW', 'OIHW', 'NCHW'))         # (B,F,T,1)
        conv = jax.nn.relu(conv + b[None, :, None, None])[:, :, :, 0]
        feats.append(jnp.max(conv, axis=2))                     # (B, F)
    feat = jnp.concatenate(feats, axis=1)                       # (B, 4F)
    lm = feat @ weights['MSE_weights'].reshape(1, -1).T + weights['MSE_bias']
    lc = feat @ weights['CE_weights'].reshape(n_classes, -1).T + weights['CE_bias']
    return [lm, lc]


if __name__ == "__main__":
    # Small shapes consistent with the module (embed_size / num_filters scaled).
    B, L = 16, 16
    VOCAB = 50
    EMBED_SIZE = 32
    NUM_FILTERS = 8
    N_CLASSES = 100
    NFS = len(FILTER_SIZES)

    key = jax.random.PRNGKey(0)
    keys = jax.random.split(key, 12)

    x_ids = jax.random.randint(keys[0], (B, L), 0, VOCAB, dtype=jnp.int32)
    embedding_matrix = 0.1 * jax.random.normal(
        keys[1], (VOCAB, EMBED_SIZE), dtype=jnp.float32)

    weights = {}
    for i, fs in enumerate(FILTER_SIZES):
        weights[f'conv{i}_weights'] = 0.1 * jax.random.normal(
            keys[2 + i], (NUM_FILTERS * 1 * fs * EMBED_SIZE,), dtype=jnp.float32)
        weights[f'conv{i}_bias'] = 0.01 * jax.random.normal(
            keys[6 + i], (NUM_FILTERS,), dtype=jnp.float32)
    weights['MSE_weights'] = 0.1 * jax.random.normal(
        keys[10], (1 * NFS * NUM_FILTERS,), dtype=jnp.float32)
    weights['MSE_bias'] = jnp.zeros((1,), dtype=jnp.float32)
    weights['CE_weights'] = 0.1 * jax.random.normal(
        keys[11], (N_CLASSES * NFS * NUM_FILTERS,), dtype=jnp.float32)
    weights['CE_bias'] = jnp.zeros((N_CLASSES,), dtype=jnp.float32)

    logits = cnn_target_forward(x_ids, embedding_matrix, weights,
                                NUM_FILTERS, EMBED_SIZE, N_CLASSES)
    jax.block_until_ready(logits)

    ref = reference_forward(x_ids, embedding_matrix, weights,
                            NUM_FILTERS, EMBED_SIZE, N_CLASSES)
    jax.block_until_ready(ref)

    assert logits[0].shape == (B, 1) and logits[1].shape == (B, N_CLASSES)
    # bf16 MXU operands for the conv path (f32 accumulation, f32 heads) ->
    # looser tolerance than pure f32.
    assert jnp.allclose(logits[0], ref[0], rtol=2e-2, atol=2e-2)
    assert jnp.allclose(logits[1], ref[1], rtol=2e-2, atol=2e-2)
    print("KERNEL_OK")
</pallas_src>

<mosaic_0001>
module attributes {stable_mosaic.version = 11 : i64} {
  func.func @cnn_target_kernel(%arg0: i32, %arg1: memref<8x24x32xbf16, #tpu.memory_space<vmem>>, %arg2: memref<5x32x128xbf16, #tpu.memory_space<vmem>>, %arg3: memref<16x128xf32, #tpu.memory_space<vmem>>, %arg4: memref<128x128xf32, #tpu.memory_space<vmem>>, %arg5: memref<1x128xf32, #tpu.memory_space<vmem>>, %arg6: memref<8x128xf32, #tpu.memory_space<vmem>>) attributes {dimension_semantics = [#tpu.dimension_semantics<parallel>], iteration_bounds = array<i64: 2>, scalar_prefetch = 0 : i64, scratch_operands = 0 : i64, tpu.core_type = #tpu.core_type<tc>, window_params = [{transform_indices = @transform_0, window_bounds = array<i64: 8, 24, 32>}, {pipeline_mode = #tpu.pipeline_mode<synchronous>, transform_indices = @transform_1, window_bounds = array<i64: 5, 32, 128>}, {pipeline_mode = #tpu.pipeline_mode<synchronous>, transform_indices = @transform_2, window_bounds = array<i64: 16, 128>}, {pipeline_mode = #tpu.pipeline_mode<synchronous>, transform_indices = @transform_3, window_bounds = array<i64: 128, 128>}, {pipeline_mode = #tpu.pipeline_mode<synchronous>, transform_indices = @transform_4, window_bounds = array<i64: 1, 128>}, {transform_indices = @transform_5, window_bounds = array<i64: 8, 128>}]} {
    %c0 = arith.constant 0 : index
    %c0_0 = arith.constant 0 : index
    %c0_1 = arith.constant 0 : index
    %0 = vector.load %arg1[%c0, %c0_0, %c0_1] : memref<8x24x32xbf16, #tpu.memory_space<vmem>>, vector<8x24x32xbf16>
    %1 = vector.extract_strided_slice %0 {offsets = [0, 0, 0], sizes = [8, 16, 32], strides = [1, 1, 1]} : vector<8x24x32xbf16> to vector<8x16x32xbf16>
    %2 = vector.shape_cast %1 : vector<8x16x32xbf16> to vector<128x32xbf16>
    %c0_2 = arith.constant 0 : index
    %c0_3 = arith.constant 0 : index
    %c0_4 = arith.constant 0 : index
    %3 = vector.load %arg2[%c0_2, %c0_3, %c0_4] : memref<5x32x128xbf16, #tpu.memory_space<vmem>>, vector<1x32x128xbf16>
    %4 = vector.shape_cast %3 : vector<1x32x128xbf16> to vector<32x128xbf16>
    %cst = arith.constant dense<0.000000e+00> : vector<128x128xf32>
    %5 = tpu.matmul %2, %4, %cst {dimension_numbers = #tpu.dot_dimension_numbers<[1], [0], [0], [1], [0, 0, 1, 1], [], []>} : vector<128x32xbf16>, vector<32x128xbf16>, vector<128x128xf32> -> vector<128x128xf32>
    %6 = vector.extract_strided_slice %0 {offsets = [0, 1, 0], sizes = [8, 16, 32], strides = [1, 1, 1]} : vector<8x24x32xbf16> to vector<8x16x32xbf16>
    %7 = vector.shape_cast %6 : vector<8x16x32xbf16> to vector<128x32xbf16>
    %c1 = arith.constant 1 : index
    %c0_5 = arith.constant 0 : index
    %c0_6 = arith.constant 0 : index
    %8 = vector.load %arg2[%c1, %c0_5, %c0_6] : memref<5x32x128xbf16, #tpu.memory_space<vmem>>, vector<1x32x128xbf16>
    %9 = vector.shape_cast %8 : vector<1x32x128xbf16> to vector<32x128xbf16>
    %cst_7 = arith.constant dense<0.000000e+00> : vector<128x128xf32>
    %10 = tpu.matmul %7, %9, %cst_7 {dimension_numbers = #tpu.dot_dimension_numbers<[1], [0], [0], [1], [0, 0, 1, 1], [], []>} : vector<128x32xbf16>, vector<32x128xbf16>, vector<128x128xf32> -> vector<128x128xf32>
    %11 = arith.addf %5, %10 : vector<128x128xf32>
    %12 = vector.extract_strided_slice %0 {offsets = [0, 2, 0], sizes = [8, 16, 32], strides = [1, 1, 1]} : vector<8x24x32xbf16> to vector<8x16x32xbf16>
    %13 = vector.shape_cast %12 : vector<8x16x32xbf16> to vector<128x32xbf16>
    %c2 = arith.constant 2 : index
    %c0_8 = arith.constant 0 : index
    %c0_9 = arith.constant 0 : index
    %14 = vector.load %arg2[%c2, %c0_8, %c0_9] : memref<5x32x128xbf16, #tpu.memory_space<vmem>>, vector<1x32x128xbf16>
    %15 = vector.shape_cast %14 : vector<1x32x128xbf16> to vector<32x128xbf16>
    %cst_10 = arith.constant dense<0.000000e+00> : vector<128x128xf32>
    %16 = tpu.matmul %13, %15, %cst_10 {dimension_numbers = #tpu.dot_dimension_numbers<[1], [0], [0], [1], [0, 0, 1, 1], [], []>} : vector<128x32xbf16>, vector<32x128xbf16>, vector<128x128xf32> -> vector<128x128xf32>
    %17 = arith.addf %11, %16 : vector<128x128xf32>
    %18 = vector.extract_strided_slice %0 {offsets = [0, 3, 0], sizes = [8, 16, 32], strides = [1, 1, 1]} : vector<8x24x32xbf16> to vector<8x16x32xbf16>
    %19 = vector.shape_cast %18 : vector<8x16x32xbf16> to vector<128x32xbf16>
    %c3 = arith.constant 3 : index
    %c0_11 = arith.constant 0 : index
    %c0_12 = arith.constant 0 : index
    %20 = vector.load %arg2[%c3, %c0_11, %c0_12] : memref<5x32x128xbf16, #tpu.memory_space<vmem>>, vector<1x32x128xbf16>
    %21 = vector.shape_cast %20 : vector<1x32x128xbf16> to vector<32x128xbf16>
    %cst_13 = arith.constant dense<0.000000e+00> : vector<128x128xf32>
    %22 = tpu.matmul %19, %21, %cst_13 {dimension_numbers = #tpu.dot_dimension_numbers<[1], [0], [0], [1], [0, 0, 1, 1], [], []>} : vector<128x32xbf16>, vector<32x128xbf16>, vector<128x128xf32> -> vector<128x128xf32>
    %23 = arith.addf %17, %22 : vector<128x128xf32>
    %24 = vector.extract_strided_slice %0 {offsets = [0, 4, 0], sizes = [8, 16, 32], strides = [1, 1, 1]} : vector<8x24x32xbf16> to vector<8x16x32xbf16>
    %25 = vector.shape_cast %24 : vector<8x16x32xbf16> to vector<128x32xbf16>
    %c4 = arith.constant 4 : index
    %c0_14 = arith.constant 0 : index
    %c0_15 = arith.constant 0 : index
    %26 = vector.load %arg2[%c4, %c0_14, %c0_15] : memref<5x32x128xbf16, #tpu.memory_space<vmem>>, vector<1x32x128xbf16>
    %27 = vector.shape_cast %26 : vector<1x32x128xbf16> to vector<32x128xbf16>
    %cst_16 = arith.constant dense<0.000000e+00> : vector<128x128xf32>
    %28 = tpu.matmul %25, %27, %cst_16 {dimension_numbers = #tpu.dot_dimension_numbers<[1], [0], [0], [1], [0, 0, 1, 1], [], []>} : vector<128x32xbf16>, vector<32x128xbf16>, vector<128x128xf32> -> vector<128x128xf32>
    %29 = arith.addf %23, %28 : vector<128x128xf32>
    %30 = vector.shape_cast %29 : vector<128x128xf32> to vector<8x16x128xf32>
    %c0_17 = arith.constant 0 : index
    %c0_18 = arith.constant 0 : index
    %31 = vector.load %arg3[%c0_17, %c0_18] : memref<16x128xf32, #tpu.memory_space<vmem>>, vector<16x128xf32>
    %32 = vector.shape_cast %31 : vector<16x128xf32> to vector<1x16x128xf32>
    %33 = vector.broadcast %32 : vector<1x16x128xf32> to vector<8x16x128xf32>
    %34 = arith.addf %30, %33 : vector<8x16x128xf32>
    %cst_19 = arith.constant dense<0xFF800000> : vector<8x128xf32>
    %35 = vector.multi_reduction <maximumf>, %34, %cst_19 [1] : vector<8x16x128xf32> to vector<8x128xf32>
    %cst_20 = arith.constant 0.000000e+00 : f32
    %36 = vector.broadcast %cst_20 : f32 to vector<8x128xf32>
    %37 = arith.maximumf %35, %36 : vector<8x128xf32>
    %c0_21 = arith.constant 0 : index
    %c0_22 = arith.constant 0 : index
    %38 = vector.load %arg4[%c0_21, %c0_22] : memref<128x128xf32, #tpu.memory_space<vmem>>, vector<128x128xf32>
    %cst_23 = arith.constant dense<0.000000e+00> : vector<8x128xf32>
    %39 = tpu.matmul %37, %38, %cst_23 {dimension_numbers = #tpu.dot_dimension_numbers<[1], [0], [0], [1], [0, 0, 1, 1], [], []>} : vector<8x128xf32>, vector<128x128xf32>, vector<8x128xf32> -> vector<8x128xf32>
    %c0_24 = arith.constant 0 : index
    %c0_25 = arith.constant 0 : index
    %40 = vector.load %arg5[%c0_24, %c0_25] : memref<1x128xf32, #tpu.memory_space<vmem>>, vector<1x128xf32>
    %41 = vector.broadcast %40 : vector<1x128xf32> to vector<8x128xf32>
    %42 = arith.addf %39, %41 : vector<8x128xf32>
    %c0_26 = arith.constant 0 : index
    %c0_27 = arith.constant 0 : index
    %43 = vector.load %arg6[%c0_26, %c0_27] : memref<8x128xf32, #tpu.memory_space<vmem>>, vector<8x128xf32>
    tpu.vector_store %arg6[%c0_26, %c0_27], %42 {strides = array<i32>} : memref<8x128xf32, #tpu.memory_space<vmem>>, vector<8x128xf32>,
    return
  }
  func.func @transform_0(%arg0: i32) -> (i32, i32, i32) {
    %c0_i32 = arith.constant 0 : i32
    %c0_i32_0 = arith.constant 0 : i32
    %c0_i32_1 = arith.constant 0 : i32
    return %arg0, %c0_i32, %c0_i32_0 : i32, i32, i32
  }
  func.func @transform_1(%arg0: i32) -> (i32, i32, i32) {
    %c0_i32 = arith.constant 0 : i32
    %c0_i32_0 = arith.constant 0 : i32
    %c0_i32_1 = arith.constant 0 : i32
    %c0_i32_2 = arith.constant 0 : i32
    return %c0_i32, %c0_i32_0, %c0_i32_1 : i32, i32, i32
  }
  func.func @transform_2(%arg0: i32) -> (i32, i32) {
    %c0_i32 = arith.constant 0 : i32
    %c0_i32_0 = arith.constant 0 : i32
    %c0_i32_1 = arith.constant 0 : i32
    return %c0_i32, %c0_i32_0 : i32, i32
  }
  func.func @transform_3(%arg0: i32) -> (i32, i32) {
    %c0_i32 = arith.constant 0 : i32
    %c0_i32_0 = arith.constant 0 : i32
    %c0_i32_1 = arith.constant 0 : i32
    return %c0_i32, %c0_i32_0 : i32, i32
  }
  func.func @transform_4(%arg0: i32) -> (i32, i32) {
    %c0_i32 = arith.constant 0 : i32
    %c0_i32_0 = arith.constant 0 : i32
    %c0_i32_1 = arith.constant 0 : i32
    return %c0_i32, %c0_i32_0 : i32, i32
  }
  func.func @transform_5(%arg0: i32) -> (i32, i32) {
    %c0_i32 = arith.constant 0 : i32
    %c0_i32_0 = arith.constant 0 : i32
    return %arg0, %c0_i32 : i32, i32
  }
}

</mosaic_0001>

<llo_original>
// kernel: tpu_custom_call.1
$region0: #{tpu_custom_call.1}
  #allocation0 [shape = 'u32[]', space=smem, size = 0x4, offset = 0x4, fixed_abs, tag = 'smem constant byte address 0x4 - core index']
  #allocation1 [shape = 'u32[144,128]{1,0:T(1,128)}', space=vmem, size = 0x12000, scoped, tag = 'internal scratch']
  %s0 = inlined_call_operand.hbm [shape: bf16[16,24,32], index: 0, kind: input, shape index: {}]
  %s1 = inlined_call_operand.hbm [shape: bf16[5,32,128], index: 1, kind: input, shape index: {}]
  %s2 = inlined_call_operand.hbm [shape: f32[16,128], index: 2, kind: input, shape index: {}]
  %s3 = inlined_call_operand.hbm [shape: f32[128,128], index: 3, kind: input, shape index: {}]
  %s4 = inlined_call_operand.vmem [shape: f32[1,128], index: 4, kind: input, shape index: {}]
  %s5 = inlined_call_operand.hbm [shape: f32[16,128], index: 5, kind: output, shape index: {}]
  %s6 = sld [smem:[#allocation0]]
  $region69: #{tpu_custom_call.1} parent=0
    _
  %s8 = ssub.s32 1, %s6
  %s9 = scalar_select 0, %s8, %s6
  $region1: #{tpu_custom_call.1} parent=0
    #allocation2 [shape = 'u8[98304]{0}', space=vmem, size = 0x18000, scoped, tag = 'input window, operand 0']
    #allocation3 [shape = 's32[2]{0}', space=sflag, size = 0x8, scoped, tag = 'scoped memory for tpu_custom_call.1']
    #allocation4 [shape = 's32[2]{0}', space=sflag, size = 0x8, scoped, tag = 'scoped memory for tpu_custom_call.1']
    #allocation5 [shape = 'u8[40960]{0}', space=vmem, size = 0xa000, scoped, tag = 'input window, operand 1, single buffered']
    #allocation6 [shape = 's32[1]{0}', space=sflag, size = 0x4, scoped, tag = 'scoped memory for tpu_custom_call.1']
    #allocation7 [shape = 'u8[8192]{0}', space=vmem, size = 0x2000, scoped, tag = 'input window, operand 2, single buffered']
    #allocation8 [shape = 'u8[65536]{0}', space=vmem, size = 0x10000, scoped, tag = 'input window, operand 3, single buffered']
    #allocation9 [shape = 's32[1]{0}', space=sflag, size = 0x4, scoped, tag = 'scoped memory for tpu_custom_call.1']
    #allocation10 [shape = 'u8[8192]{0}', space=vmem, size = 0x2000, scoped, tag = 'output window, operand 0']
    %10 = vsyncpa [#allocation3], 0
    %s11 = scalar_lea.sflag [#allocation3], 1
    %12 = vsyncpa %s11, 0
    %13 = vsyncpa [#allocation6], 0
    %14 = vsyncpa [#allocation9], 0
    %15 = vsyncpa [#allocation4], 0
    %s16 = scalar_lea.sflag [#allocation4], 1
    %17 = vsyncpa %s16, 0
    loop: start=0, step=1, limit=4
    $region2: #{tpu_custom_call.1} parent=1 // loop_pre_header
      _
    $region3: #{tpu_custom_call.1} parent=1 // loop_header
      %s19 = sphi 0, %s23
      %p20 = scmp.ge.s32.totalorder %s19, 4
      %s29 = sphi 0, %s31
      %s32 = sphi 0, %s29
      %s33 = sphi 0, %s32
      %s49 = sphi 0, %s33
      %s53 = sphi 0, %s53
      %s55 = sphi 0, %s53
      %s56 = sphi 0, %s55
      %s70 = sphi 0, %s56
      %s74 = sphi 0, %s74
      %s76 = sphi 0, %s74
      %s77 = sphi 0, %s76
      %s91 = sphi 0, %s77
      %s95 = sphi 0, %s95
      %s97 = sphi 0, %s95
      %s98 = sphi 0, %s97
      %s112 = sphi 0, %s98
      %s116 = sphi 0, %s116
      %s118 = sphi 0, %s116
      %s119 = sphi 0, %s118
      %s133 = sphi 0, %s119
      %s139 = sphi 0, %s141
      %s142 = sphi 0, %s139
      %s143 = sphi 0, %s142
      %s159 = sphi 0, %s143
    $region4: #{tpu_custom_call.1} parent=1 // loop_header_branch
      %22 = sbr.rel (%p20) target = $region8
    $region5: #{tpu_custom_call.1} parent=1 // loop_body
      %s24 = ssub.s32 %s19, 1
      %s25 = ssub.s32 %s19, 2
      %s26 = sadd.s32 %s19, 1
      %s27 = ssub.s32 %s19, %s26
      %p28 = scmp.eq.s32.totalorder %s27, 0
      %s30 = sadd.s32 %s29, 1
      %s31 = scalar_select %p28, %s29, %s30
      %p34 = pneg %p28
      %p35 = scmp.eq.s32.totalorder %s19, 1
      %p36 = por %p34, %p35
      %p37 = scmp.ne.s32.totalorder %s29, %s32
      %p38 = scmp.eq.s32.totalorder %s19, 0
      %p39 = por %p37, %p38
      %p40 = scmp.ne.s32.totalorder %s29, %s32
      %p41 = scmp.eq.s32.totalorder %s24, 1
      %p42 = por %p40, %p41
      %p43 = scmp.ne.s32.totalorder %s32, %s33
      %p44 = scmp.eq.s32.totalorder %s24, 0
      %p45 = por %p43, %p44
      %p46 = scmp.ne.s32.totalorder %s32, %s33
      %p47 = scmp.eq.s32.totalorder %s25, 1
      %p48 = por %p46, %p47
      %p50 = scmp.ne.s32.totalorder %s33, %s49
      %p51 = scmp.eq.s32.totalorder %s25, 0
      %p52 = por %p50, %p51
      %s54 = sadd.s32 %s53, 1
      %p57 = scmp.eq.s32.totalorder %s19, 1
      %p58 = scmp.ne.s32.totalorder %s53, %s55
      %p59 = scmp.eq.s32.totalorder %s19, 0
      %p60 = por %p58, %p59
      %p61 = scmp.ne.s32.totalorder %s53, %s55
      %p62 = scmp.eq.s32.totalorder %s24, 1
      %p63 = por %p61, %p62
      %p64 = scmp.ne.s32.totalorder %s55, %s56
      %p65 = scmp.eq.s32.totalorder %s24, 0
      %p66 = por %p64, %p65
      %p67 = scmp.ne.s32.totalorder %s55, %s56
      %p68 = scmp.eq.s32.totalorder %s25, 1
      %p69 = por %p67, %p68
      %p71 = scmp.ne.s32.totalorder %s56, %s70
      %p72 = scmp.eq.s32.totalorder %s25, 0
      %p73 = por %p71, %p72
      %s75 = sadd.s32 %s74, 1
      %p78 = scmp.eq.s32.totalorder %s19, 1
      %p79 = scmp.ne.s32.totalorder %s74, %s76
      %p80 = scmp.eq.s32.totalorder %s19, 0
      %p81 = por %p79, %p80
      %p82 = scmp.ne.s32.totalorder %s74, %s76
      %p83 = scmp.eq.s32.totalorder %s24, 1
      %p84 = por %p82, %p83
      %p85 = scmp.ne.s32.totalorder %s76, %s77
      %p86 = scmp.eq.s32.totalorder %s24, 0
      %p87 = por %p85, %p86
      %p88 = scmp.ne.s32.totalorder %s76, %s77
      %p89 = scmp.eq.s32.totalorder %s25, 1
      %p90 = por %p88, %p89
      %p92 = scmp.ne.s32.totalorder %s77, %s91
      %p93 = scmp.eq.s32.totalorder %s25, 0
      %p94 = por %p92, %p93
      %s96 = sadd.s32 %s95, 1
      %p99 = scmp.eq.s32.totalorder %s19, 1
      %p100 = scmp.ne.s32.totalorder %s95, %s97
      %p101 = scmp.eq.s32.totalorder %s19, 0
      %p102 = por %p100, %p101
      %p103 = scmp.ne.s32.totalorder %s95, %s97
      %p104 = scmp.eq.s32.totalorder %s24, 1
      %p105 = por %p103, %p104
      %p106 = scmp.ne.s32.totalorder %s97, %s98
      %p107 = scmp.eq.s32.totalorder %s24, 0
      %p108 = por %p106, %p107
      %p109 = scmp.ne.s32.totalorder %s97, %s98
      %p110 = scmp.eq.s32.totalorder %s25, 1
      %p111 = por %p109, %p110
      %p113 = scmp.ne.s32.totalorder %s98, %s112
      %p114 = scmp.eq.s32.totalorder %s25, 0
      %p115 = por %p113, %p114
      %s117 = sadd.s32 %s116, 1
      %p120 = scmp.eq.s32.totalorder %s19, 1
      %p121 = scmp.ne.s32.totalorder %s116, %s118
      %p122 = scmp.eq.s32.totalorder %s19, 0
      %p123 = por %p121, %p122
      %p124 = scmp.ne.s32.totalorder %s116, %s118
      %p125 = scmp.eq.s32.totalorder %s24, 1
      %p126 = por %p124, %p125
      %p127 = scmp.ne.s32.totalorder %s118, %s119
      %p128 = scmp.eq.s32.totalorder %s24, 0
      %p129 = por %p127, %p128
      %p130 = scmp.ne.s32.totalorder %s118, %s119
      %p131 = scmp.eq.s32.totalorder %s25, 1
      %p132 = por %p130, %p131
      %p134 = scmp.ne.s32.totalorder %s119, %s133
      %p135 = scmp.eq.s32.totalorder %s25, 0
      %p136 = por %p134, %p135
      %s137 = ssub.s32 %s19, %s26
      %p138 = scmp.eq.s32.totalorder %s137, 0
      %s140 = sadd.s32 %s139, 1
      %s141 = scalar_select %p138, %s139, %s140
      %p144 = pneg %p138
      %p145 = scmp.eq.s32.totalorder %s19, 1
      %p146 = por %p144, %p145
      %p147 = scmp.ne.s32.totalorder %s139, %s142
      %p148 = scmp.eq.s32.totalorder %s19, 0
      %p149 = por %p147, %p148
      %p150 = scmp.ne.s32.totalorder %s139, %s142
      %p151 = scmp.eq.s32.totalorder %s24, 1
      %p152 = por %p150, %p151
      %p153 = scmp.ne.s32.totalorder %s142, %s143
      %p154 = scmp.eq.s32.totalorder %s24, 0
      %p155 = por %p153, %p154
      %p156 = scmp.ne.s32.totalorder %s142, %s143
      %p157 = scmp.eq.s32.totalorder %s25, 1
      %p158 = por %p156, %p157
      %p160 = scmp.ne.s32.totalorder %s143, %s159
      %p161 = scmp.eq.s32.totalorder %s25, 0
      %p162 = por %p160, %p161
      %p163 = scmp.le.s32.totalorder 1, %s19
      %p164 = scmp.lt.s32.totalorder %s19, 3
      %p165 = pnand %p163, %p164
      %p166 = pneg %p165
      // Predicated region
      $region9: #{tpu_custom_call.1} parent=5 // pred_check
        _
      $region10: #{tpu_custom_call.1} parent=5 // pred_check_branch
        %168 = sbr.rel (%p165) target = $region12
      $region11: #{tpu_custom_call.1} parent=5 // pred_region
        %s169 = ssub.s32 %s19, 1
        // Predicated region
        $region13: #{tpu_custom_call.1} parent=11 // pred_check
          %p170 = pneg %p66
        $region14: #{tpu_custom_call.1} parent=11 // pred_check_branch
          %172 = sbr.rel (%p170) target = $region16
        $region15: #{tpu_custom_call.1} parent=11 // pred_region
          %s174 = ssub.s32 1280, 1280
          %175 = vsyncadd [#allocation6], %s174
          %s176 = sshll.u32 [#allocation5], 4
          %s177 = int_to_ptr.vmem [resolvable:$true] %s176
          %182 = dma.hbm_to_vmem [thread:$0]  %s1, 1280, %s177, [#allocation6], 64, 64, 4
        $region16: #{tpu_custom_call.1} parent=11 // pred_fallthru
          _
        // Predicated region
        $region17: #{tpu_custom_call.1} parent=11 // pred_check
          %p183 = pneg %p87
        $region18: #{tpu_custom_call.1} parent=11 // pred_check_branch
          %185 = sbr.rel (%p183) target = $region20
        $region19: #{tpu_custom_call.1} parent=11 // pred_region
          %s187 = ssub.s32 256, 256
          %188 = vsyncadd [#allocation6], %s187
          %s189 = sshll.u32 [#allocation7], 4
          %s190 = int_to_ptr.vmem [resolvable:$true] %s189
          %195 = dma.hbm_to_vmem [thread:$0]  %s2, 256, %s190, [#allocation6], 128, 128, 8
        $region20: #{tpu_custom_call.1} parent=11 // pred_fallthru
          _
        // Predicated region
        $region21: #{tpu_custom_call.1} parent=11 // pred_check
          %p196 = pneg %p108
        $region22: #{tpu_custom_call.1} parent=11 // pred_check_branch
          %198 = sbr.rel (%p196) target = $region24
        $region23: #{tpu_custom_call.1} parent=11 // pred_region
          %s200 = ssub.s32 2048, 2048
          %201 = vsyncadd [#allocation9], %s200
          %s202 = sshll.u32 [#allocation8], 4
          %s203 = int_to_ptr.vmem [resolvable:$true] %s202
          %208 = dma.hbm_to_vmem [thread:$0]  %s3, 2048, %s203, [#allocation9], 128, 128, 8
        $region24: #{tpu_custom_call.1} parent=11 // pred_fallthru
          _
        // Predicated region
        $region25: #{tpu_custom_call.1} parent=11 // pred_check
          %p209 = pneg %p129
        $region26: #{tpu_custom_call.1} parent=11 // pred_check_branch
          %211 = sbr.rel (%p209) target = $region28
        $region27: #{tpu_custom_call.1} parent=11 // pred_region
          _
        $region28: #{tpu_custom_call.1} parent=11 // pred_fallthru
          _
      $region12: #{tpu_custom_call.1} parent=5 // pred_fallthru
        _
      %p212 = scmp.lt.s32.totalorder %s19, 2
      // Predicated region
      $region29: #{tpu_custom_call.1} parent=5 // pred_check
        %p213 = pneg %p212
      $region30: #{tpu_custom_call.1} parent=5 // pred_check_branch
        %215 = sbr.rel (%p213) target = $region32
      $region31: #{tpu_custom_call.1} parent=5 // pred_region
        // Predicated region
        $region33: #{tpu_custom_call.1} parent=31 // pred_check
          %p216 = pneg %p39
        $region34: #{tpu_custom_call.1} parent=31 // pred_check_branch
          %218 = sbr.rel (%p216) target = $region36
        $region35: #{tpu_custom_call.1} parent=31 // pred_region
          %s219 = sand.u32 %s29, 1
          %s220 = scalar_lea.sflag [#allocation3], %s219
          %s221 = sand.u32 %s29, 1
          %s222 = smul.addr %s221, 96
          %s223 = scalar_lea.vmem [#allocation2], %s222
          %s224 = smul.u32 8, %s19
          %s226 = ssub.s32 1536, 1536
          %227 = vsyncadd %s220, %s226
          %s228 = smul.addr %s224, 3
          %s229 = smul.addr %s228, 64
          %s230 = scalar_lea.hbm %s0, %s229
          %s231 = sshll.u32 %s223, 4
          %s232 = int_to_ptr.vmem [resolvable:$true] %s231
          %237 = dma.hbm_to_vmem [thread:$0]  %s230, 1536, %s232, %s220, 64, 64, 4
        $region36: #{tpu_custom_call.1} parent=31 // pred_fallthru
          _
      $region32: #{tpu_custom_call.1} parent=5 // pred_fallthru
        _
      %p238 = scmp.le.s32.totalorder 1, %s19
      %p239 = scmp.lt.s32.totalorder %s19, 3
      %p240 = pnand %p238, %p239
      %p241 = pneg %p240
      // Predicated region
      $region37: #{tpu_custom_call.1} parent=5 // pred_check
        _
      $region38: #{tpu_custom_call.1} parent=5 // pred_check_branch
        %243 = sbr.rel (%p240) target = $region40
      $region39: #{tpu_custom_call.1} parent=5 // pred_region
        %s244 = ssub.s32 %s19, 1
        %s245 = sand.u32 %s32, 1
        %s246 = scalar_lea.sflag [#allocation3], %s245
        %s247 = sand.u32 %s32, 1
        %s248 = smul.addr %s247, 96
        %s249 = scalar_lea.vmem [#allocation2], %s248
        // Predicated region
        $region41: #{tpu_custom_call.1} parent=39 // pred_check
          %p250 = pneg %p45
        $region42: #{tpu_custom_call.1} parent=39 // pred_check_branch
          %252 = sbr.rel (%p250) target = $region44
        $region43: #{tpu_custom_call.1} parent=39 // pred_region
          %253 = dma.done %s246, 1536
        $region44: #{tpu_custom_call.1} parent=39 // pred_fallthru
          _
        // Predicated region
        $region45: #{tpu_custom_call.1} parent=39 // pred_check
          %p254 = pneg %p66
        $region46: #{tpu_custom_call.1} parent=39 // pred_check_branch
          %256 = sbr.rel (%p254) target = $region48
        $region47: #{tpu_custom_call.1} parent=39 // pred_region
          %257 = dma.done [#allocation6], 1280
        $region48: #{tpu_custom_call.1} parent=39 // pred_fallthru
          _
        // Predicated region
        $region49: #{tpu_custom_call.1} parent=39 // pred_check
          %p258 = pneg %p87
        $region50: #{tpu_custom_call.1} parent=39 // pred_check_branch
          %260 = sbr.rel (%p258) target = $region52
        $region51: #{tpu_custom_call.1} parent=39 // pred_region
          %261 = dma.done [#allocation6], 256
        $region52: #{tpu_custom_call.1} parent=39 // pred_fallthru
          _
        // Predicated region
        $region53: #{tpu_custom_call.1} parent=39 // pred_check
          %p262 = pneg %p108
        $region54: #{tpu_custom_call.1} parent=39 // pred_check_branch
          %264 = sbr.rel (%p262) target = $region56
        $region55: #{tpu_custom_call.1} parent=39 // pred_region
          %265 = dma.done [#allocation9], 2048
        $region56: #{tpu_custom_call.1} parent=39 // pred_fallthru
          _
        %s266 = sand.u32 %s32, 1
        %s267 = scalar_lea.sflag [#allocation3], %s266
        %s268 = sand.u32 %s32, 1
        %s269 = smul.addr %s268, 96
        %s270 = scalar_lea.vmem [#allocation2], %s269
        %p271 = pneg %p45
        %p272 = pneg %p42
        %p273 = pneg %p66
        %p274 = pneg %p63
        %p275 = pneg %p87
        %p276 = pneg %p84
        %p277 = pneg %p108
        %p278 = pneg %p105
        %p279 = pneg %p129
        %p280 = pneg %p126
        %p281 = pneg %p155
        %p282 = pneg %p152
        %s283 = sand.u32 %s142, 1
        %s284 = scalar_lea.sflag [#allocation4], %s283
        %s285 = sand.u32 %s142, 1
        %s286 = smul.addr %s285, 8
        %s287 = scalar_lea.vmem [#allocation10], %s286
        %s288 = smul.u32 8, %s24
        %v290 = vld [vmem:[%s249] sm:$0xf]
        %v291 = vld [vmem:[%s249 + $0x4] sm:$0xf]
        %v292 = vld [vmem:[%s249 + $0x8] sm:$0xf]
        %v293 = vld [vmem:[%s249 + $0xc] sm:$0xf]
        %v294 = vld [vmem:[%s249 + $0x10] sm:$0xf]
        %v295 = vld [vmem:[%s249 + $0x14] sm:$0xf]
        %v296 = vld [vmem:[%s249 + $0x18] sm:$0xf]
        %v297 = vld [vmem:[%s249 + $0x1c] sm:$0xf]
        %v298 = vld [vmem:[%s249 + $0x20] sm:$0xf]
        %v299 = vld [vmem:[%s249 + $0x24] sm:$0xf]
        %v300 = vld [vmem:[%s249 + $0x28] sm:$0xf]
        %v301 = vld [vmem:[%s249 + $0x2c] sm:$0xf]
        %v302 = vld [vmem:[%s249 + $0x30] sm:$0xf]
        %v303 = vld [vmem:[%s249 + $0x34] sm:$0xf]
        %v304 = vld [vmem:[%s249 + $0x38] sm:$0xf]
        %v305 = vld [vmem:[%s249 + $0x3c] sm:$0xf]
        %v306 = vld [vmem:[%s249 + $0x40] sm:$0xf]
        %v307 = vld [vmem:[%s249 + $0x44] sm:$0xf]
        %v308 = vld [vmem:[%s249 + $0x48] sm:$0xf]
        %v309 = vld [vmem:[%s249 + $0x4c] sm:$0xf]
        %v310 = vld [vmem:[%s249 + $0x50] sm:$0xf]
        %v311 = vld [vmem:[%s249 + $0x54] sm:$0xf]
        %v312 = vld [vmem:[%s249 + $0x58] sm:$0xf]
        %v313 = vld [vmem:[%s249 + $0x5c] sm:$0xf]
        %v314 = vld [vmem:[#allocation5] sm:$0xf]
        %v315 = vld [vmem:[#allocation5 + $0x4] sm:$0xf]
        %v316 = vld [vmem:[#allocation5 + $0x8] sm:$0xf]
        %v317 = vld [vmem:[#allocation5 + $0xc] sm:$0xf]
        %vm318 = vsmask.f32 3328
        %vm319 = vsmask.f32 7440
        %vm320 = vmor %vm318, %vm319
        %v322 = vshrl.u32 %v290, 16
        %v324 = vrot.slane %v322, 4
        %v325 = vshll.u32 %v290, 16
        %v327 = vrot.slane %v325, 5
        %v328 = vor.u32 %v324, %v327
        %v329 = vrot.slane %v328, 4
        %v331 = vshll.u32 %v291, 16
        %v333 = vrot.slane %v331, 5
        %v334 = vsel %vm320, %v329, %v333
        %v335 = vshrl.u32 %v291, 16
        %v337 = vrot.slane %v335, 4
        %v338 = vor.u32 %v337, %v333
        %v339 = vrot.slane %v338, 4
        %v341 = vshll.u32 %v292, 16
        %v343 = vrot.slane %v341, 5
        %v344 = vsel %vm320, %v339, %v343
        %v346 = vshrl.u32 %v293, 16
        %v348 = vrot.slane %v346, 4
        %v349 = vshll.u32 %v293, 16
        %v351 = vrot.slane %v349, 5
        %v352 = vor.u32 %v348, %v351
        %v353 = vrot.slane %v352, 4
        %v355 = vshll.u32 %v294, 16
        %v357 = vrot.slane %v355, 5
        %v358 = vsel %vm320, %v353, %v357
        %v359 = vshrl.u32 %v294, 16
        %v361 = vrot.slane %v359, 4
        %v362 = vor.u32 %v361, %v357
        %v363 = vrot.slane %v362, 4
        %v365 = vshll.u32 %v295, 16
        %v367 = vrot.slane %v365, 5
        %v368 = vsel %vm320, %v363, %v367
        %v370 = vshrl.u32 %v296, 16
        %v372 = vrot.slane %v370, 4
        %v373 = vshll.u32 %v296, 16
        %v375 = vrot.slane %v373, 5
        %v376 = vor.u32 %v372, %v375
        %v377 = vrot.slane %v376, 4
        %v379 = vshll.u32 %v297, 16
        %v381 = vrot.slane %v379, 5
        %v382 = vsel %vm320, %v377, %v381
        %v383 = vshrl.u32 %v297, 16
        %v385 = vrot.slane %v383, 4
        %v386 = vor.u32 %v385, %v381
        %v387 = vrot.slane %v386, 4
        %v389 = vshll.u32 %v298, 16
        %v391 = vrot.slane %v389, 5
        %v392 = vsel %vm320, %v387, %v391
        %v394 = vshrl.u32 %v299, 16
        %v396 = vrot.slane %v394, 4
        %v397 = vshll.u32 %v299, 16
        %v399 = vrot.slane %v397, 5
        %v400 = vor.u32 %v396, %v399
        %v401 = vrot.slane %v400, 4
        %v403 = vshll.u32 %v300, 16
        %v405 = vrot.slane %v403, 5
        %v406 = vsel %vm320, %v401, %v405
        %v407 = vshrl.u32 %v300, 16
        %v409 = vrot.slane %v407, 4
        %v410 = vor.u32 %v409, %v405
        %v411 = vrot.slane %v410, 4
        %v413 = vshll.u32 %v301, 16
        %v415 = vrot.slane %v413, 5
        %v416 = vsel %vm320, %v411, %v415
        %v418 = vshrl.u32 %v302, 16
        %v420 = vrot.slane %v418, 4
        %v421 = vshll.u32 %v302, 16
        %v423 = vrot.slane %v421, 5
        %v424 = vor.u32 %v420, %v423
        %v425 = vrot.slane %v424, 4
        %v427 = vshll.u32 %v303, 16
        %v429 = vrot.slane %v427, 5
        %v430 = vsel %vm320, %v425, %v429
        %v431 = vshrl.u32 %v303, 16
        %v433 = vrot.slane %v431, 4
        %v434 = vor.u32 %v433, %v429
        %v435 = vrot.slane %v434, 4
        %v437 = vshll.u32 %v304, 16
        %v439 = vrot.slane %v437, 5
        %v440 = vsel %vm320, %v435, %v439
        %v442 = vshrl.u32 %v305, 16
        %v444 = vrot.slane %v442, 4
        %v445 = vshll.u32 %v305, 16
        %v447 = vrot.slane %v445, 5
        %v448 = vor.u32 %v444, %v447
        %v449 = vrot.slane %v448, 4
        %v451 = vshll.u32 %v306, 16
        %v453 = vrot.slane %v451, 5
        %v454 = vsel %vm320, %v449, %v453
        %v455 = vshrl.u32 %v306, 16
        %v457 = vrot.slane %v455, 4
        %v458 = vor.u32 %v457, %v453
        %v459 = vrot.slane %v458, 4
        %v461 = vshll.u32 %v307, 16
        %v463 = vrot.slane %v461, 5
        %v464 = vsel %vm320, %v459, %v463
        %v466 = vshrl.u32 %v308, 16
        %v468 = vrot.slane %v466, 4
        %v469 = vshll.u32 %v308, 16
        %v471 = vrot.slane %v469, 5
        %v472 = vor.u32 %v468, %v471
        %v473 = vrot.slane %v472, 4
        %v475 = vshll.u32 %v309, 16
        %v477 = vrot.slane %v475, 5
        %v478 = vsel %vm320, %v473, %v477
        %v479 = vshrl.u32 %v309, 16
        %v481 = vrot.slane %v479, 4
        %v482 = vor.u32 %v481, %v477
        %v483 = vrot.slane %v482, 4
        %v485 = vshll.u32 %v310, 16
        %v487 = vrot.slane %v485, 5
        %v488 = vsel %vm320, %v483, %v487
        %v490 = vshrl.u32 %v311, 16
        %v492 = vrot.slane %v490, 4
        %v493 = vshll.u32 %v311, 16
        %v495 = vrot.slane %v493, 5
        %v496 = vor.u32 %v492, %v495
        %v497 = vrot.slane %v496, 4
        %v499 = vshll.u32 %v312, 16
        %v501 = vrot.slane %v499, 5
        %v502 = vsel %vm320, %v497, %v501
        %v503 = vshrl.u32 %v312, 16
        %v505 = vrot.slane %v503, 4
        %v506 = vor.u32 %v505, %v501
        %v507 = vrot.slane %v506, 4
        %v509 = vshll.u32 %v313, 16
        %v511 = vrot.slane %v509, 5
        %v512 = vsel %vm320, %v507, %v511
        %s513 = scalar_lea.vmem [#allocation5], 16
        %v514 = vld [vmem:[%s513] sm:$0xf]
        %v515 = vld [vmem:[%s513 + $0x4] sm:$0xf]
        %v516 = vld [vmem:[%s513 + $0x8] sm:$0xf]
        %v517 = vld [vmem:[%s513 + $0xc] sm:$0xf]
        %v518 = vunpack.c.l.b16 %v334
        %v519 = vunpack.c.l.b16 %v344
        %v520 = vunpack.c.l.b16 %v358
        %v521 = vunpack.c.l.b16 %v368
        %v522 = vunpack.c.l.b16 %v382
        %v523 = vunpack.c.l.b16 %v392
        %v524 = vunpack.c.l.b16 %v406
        %v525 = vunpack.c.l.b16 %v416
        %v526 = vunpack.c.l.b16 %v430
        %v527 = vunpack.c.l.b16 %v440
        %v528 = vunpack.c.l.b16 %v454
        %v529 = vunpack.c.l.b16 %v464
        %v530 = vunpack.c.l.b16 %v478
        %v531 = vunpack.c.l.b16 %v488
        %v532 = vunpack.c.l.b16 %v502
        %v533 = vunpack.c.l.b16 %v512
        %v534 = vpack.c.b16 %v519, %v518
        %v535 = vpack.c.b16 %v521, %v520
        %v536 = vpack.c.b16 %v523, %v522
        %v537 = vpack.c.b16 %v525, %v524
        %v538 = vpack.c.b16 %v527, %v526
        %v539 = vpack.c.b16 %v529, %v528
        %v540 = vpack.c.b16 %v531, %v530
        %v541 = vpack.c.b16 %v533, %v532
        %v546 = vunpack.c.l.b16 %v514
        %v547 = vunpack.c.l.b16 %v515
        %v548 = vunpack.c.l.b16 %v516
        %v549 = vunpack.c.l.b16 %v517
        %v550 = vpack.c.b16 %v547, %v546
        %v551 = vpack.c.b16 %v549, %v548
        %vm554 = vcmask 261120
        %v556 = vsel %vm554, %v534, 0
        %v559 = vsel %vm554, %v535, 0
        %v562 = vsel %vm554, %v536, 0
        %v565 = vsel %vm554, %v537, 0
        %v568 = vsel %vm554, %v538, 0
        %v571 = vsel %vm554, %v539, 0
        %v574 = vsel %vm554, %v540, 0
        %v577 = vsel %vm554, %v541, 0
        %579 = vmatprep.subr.bf16.mxu0 0
        %580 = vmatpush1.bf16.msra.mxu0 0
        %581 = vmatprep.subr.bf16.mxu0 0
        %582 = vmatpush1.bf16.msra.mxu0 0
        %583 = vmatprep.subr.bf16.mxu0 0
        %584 = vmatpush1.bf16.msra.mxu0 0
        %585 = vmatprep.subr.bf16.mxu0 0
        %586 = vmatpush1.bf16.msra.mxu0 0
        %587 = vmatprep.subr.bf16.mxu0 0
        %588 = vmatpush1.bf16.msra.mxu0 0
        %589 = vmatprep.subr.bf16.mxu0 0
        %590 = vmatpush1.bf16.msra.mxu0 0
        %591 = vmatprep.subr.bf16.mxu0 0
        %592 = vmatpush1.bf16.msra.mxu0 %v551
        %593 = vmatprep.subr.bf16.mxu0 0
        %594 = vmatpush1.bf16.msra.mxu0 %v550
        %595 = vmatprep.subr.bf16.mxu0 0
        %596 = vmatpush2.bf16.msra.mxu0 0
        %597 = vmatprep.subr.bf16.mxu0 0
        %598 = vmatpush2.bf16.msra.mxu0 0
        %599 = vmatprep.subr.bf16.mxu0 0
        %600 = vmatpush2.bf16.msra.mxu0 0
        %601 = vmatprep.subr.bf16.mxu0 0
        %602 = vmatpush2.bf16.msra.mxu0 0
        %603 = vmatprep.subr.bf16.mxu0 0
        %604 = vmatpush2.bf16.msra.mxu0 0
        %605 = vmatprep.subr.bf16.mxu0 0
        %606 = vmatpush2.bf16.msra.mxu0 0
        %607 = vmatprep.subr.bf16.mxu0 0
        %608 = vmatpush2.bf16.msra.mxu0 0
        %609 = vmatprep.subr.bf16.mxu0 0
        %610 = vmatpush2.bf16.msra.mxu0 0
        %611 = vmatprep.mubr.bf16.mxu0 0
        %612 = vmatmul.mubr.bf16.gmra.mxu0 %v556
        %v613 = vpop.f32.mrf.mxu0
        %v614 = vadd.f32 0.0, %v613
        %v615 = vpop.f32.mrf.mxu0
        %v616 = vpop.f32.mrf.mxu0
        %v617 = vadd.f32 0.0, %v616
        %v618 = vpop.f32.mrf.mxu0
        %619 = vmatprep.mubr.bf16.mxu0 0
        %620 = vmatmul.mubr.bf16.gmra.mxu0 %v559
        %v621 = vpop.f32.mrf.mxu0
        %v622 = vadd.f32 0.0, %v621
        %v623 = vpop.f32.mrf.mxu0
        %v624 = vpop.f32.mrf.mxu0
        %v625 = vadd.f32 0.0, %v624
        %v626 = vpop.f32.mrf.mxu0
        %627 = vmatprep.mubr.bf16.mxu0 0
        %628 = vmatmul.mubr.bf16.gmra.mxu0 %v562
        %v629 = vpop.f32.mrf.mxu0
        %v630 = vadd.f32 0.0, %v629
        %v631 = vpop.f32.mrf.mxu0
        %v632 = vpop.f32.mrf.mxu0
        %v633 = vadd.f32 0.0, %v632
        %v634 = vpop.f32.mrf.mxu0
        %635 = vmatprep.mubr.bf16.mxu0 0
        %636 = vmatmul.mubr.bf16.gmra.mxu0 %v565
        %v637 = vpop.f32.mrf.mxu0
        %v638 = vadd.f32 0.0, %v637
        %v639 = vpop.f32.mrf.mxu0
        %v640 = vpop.f32.mrf.mxu0
        %v641 = vadd.f32 0.0, %v640
        %v642 = vpop.f32.mrf.mxu0
        %643 = vmatprep.mubr.bf16.mxu0 0
        %644 = vmatmul.mubr.bf16.gmra.mxu0 %v568
        %v645 = vpop.f32.mrf.mxu0
        %v646 = vadd.f32 0.0, %v645
        %v647 = vpop.f32.mrf.mxu0
        %v648 = vpop.f32.mrf.mxu0
        %v649 = vadd.f32 0.0, %v648
        %v650 = vpop.f32.mrf.mxu0
        %651 = vmatprep.mubr.bf16.mxu0 0
        %652 = vmatmul.mubr.bf16.gmra.mxu0 %v571
        %v653 = vpop.f32.mrf.mxu0
        %v654 = vadd.f32 0.0, %v653
        %v655 = vpop.f32.mrf.mxu0
        %v656 = vpop.f32.mrf.mxu0
        %v657 = vadd.f32 0.0, %v656
        %v658 = vpop.f32.mrf.mxu0
        %659 = vmatprep.mubr.bf16.mxu0 0
        %660 = vmatmul.mubr.bf16.gmra.mxu0 %v574
        %v661 = vpop.f32.mrf.mxu0
        %v662 = vadd.f32 0.0, %v661
        %v663 = vpop.f32.mrf.mxu0
        %v664 = vpop.f32.mrf.mxu0
        %v665 = vadd.f32 0.0, %v664
        %v666 = vpop.f32.mrf.mxu0
        %667 = vmatprep.mubr.bf16.mxu0 0
        %668 = vmatmul.mubr.bf16.gmra.mxu0 %v577
        %v669 = vpop.f32.mrf.mxu0
        %v670 = vadd.f32 0.0, %v669
        %v671 = vpop.f32.mrf.mxu0
        %v672 = vpop.f32.mrf.mxu0
        %v673 = vadd.f32 0.0, %v672
        %v674 = vpop.f32.mrf.mxu0
        %675 = vdwg.mxu0
        %v692 = vunpack.c.l.b16 %v290
        %v693 = vunpack.c.l.b16 %v291
        %v694 = vunpack.c.l.b16 %v293
        %v695 = vunpack.c.l.b16 %v294
        %v696 = vunpack.c.l.b16 %v296
        %v697 = vunpack.c.l.b16 %v297
        %v698 = vunpack.c.l.b16 %v299
        %v699 = vunpack.c.l.b16 %v300
        %v700 = vunpack.c.l.b16 %v302
        %v701 = vunpack.c.l.b16 %v303
        %v702 = vunpack.c.l.b16 %v305
        %v703 = vunpack.c.l.b16 %v306
        %v704 = vunpack.c.l.b16 %v308
        %v705 = vunpack.c.l.b16 %v309
        %v706 = vunpack.c.l.b16 %v311
        %v707 = vunpack.c.l.b16 %v312
        %v708 = vpack.c.b16 %v693, %v692
        %v709 = vpack.c.b16 %v695, %v694
        %v710 = vpack.c.b16 %v697, %v696
        %v711 = vpack.c.b16 %v699, %v698
        %v712 = vpack.c.b16 %v701, %v700
        %v713 = vpack.c.b16 %v703, %v702
        %v714 = vpack.c.b16 %v705, %v704
        %v715 = vpack.c.b16 %v707, %v706
        %v720 = vunpack.c.l.b16 %v314
        %v721 = vunpack.c.l.b16 %v315
        %v722 = vunpack.c.l.b16 %v316
        %v723 = vunpack.c.l.b16 %v317
        %v724 = vpack.c.b16 %v721, %v720
        %v725 = vpack.c.b16 %v723, %v722
        %v729 = vsel %vm554, %v708, 0
        %v732 = vsel %vm554, %v709, 0
        %v735 = vsel %vm554, %v710, 0
        %v738 = vsel %vm554, %v711, 0
        %v741 = vsel %vm554, %v712, 0
        %v744 = vsel %vm554, %v713, 0
        %v747 = vsel %vm554, %v714, 0
        %v750 = vsel %vm554, %v715, 0
        %752 = vmatprep.subr.bf16.mxu0 0
        %753 = vmatpush1.bf16.msra.mxu0 0
        %754 = vmatprep.subr.bf16.mxu0 0
        %755 = vmatpush1.bf16.msra.mxu0 0
        %756 = vmatprep.subr.bf16.mxu0 0
        %757 = vmatpush1.bf16.msra.mxu0 0
        %758 = vmatprep.subr.bf16.mxu0 0
        %759 = vmatpush1.bf16.msra.mxu0 0
        %760 = vmatprep.subr.bf16.mxu0 0
        %761 = vmatpush1.bf16.msra.mxu0 0
        %762 = vmatprep.subr.bf16.mxu0 0
        %763 = vmatpush1.bf16.msra.mxu0 0
        %764 = vmatprep.subr.bf16.mxu0 0
        %765 = vmatpush1.bf16.msra.mxu0 %v725
        %766 = vmatprep.subr.bf16.mxu0 0
        %767 = vmatpush1.bf16.msra.mxu0 %v724
        %768 = vmatprep.subr.bf16.mxu0 0
        %769 = vmatpush2.bf16.msra.mxu0 0
        %770 = vmatprep.subr.bf16.mxu0 0
        %771 = vmatpush2.bf16.msra.mxu0 0
        %772 = vmatprep.subr.bf16.mxu0 0
        %773 = vmatpush2.bf16.msra.mxu0 0
        %774 = vmatprep.subr.bf16.mxu0 0
        %775 = vmatpush2.bf16.msra.mxu0 0
        %776 = vmatprep.subr.bf16.mxu0 0
        %777 = vmatpush2.bf16.msra.mxu0 0
        %778 = vmatprep.subr.bf16.mxu0 0
        %779 = vmatpush2.bf16.msra.mxu0 0
        %780 = vmatprep.subr.bf16.mxu0 0
        %781 = vmatpush2.bf16.msra.mxu0 0
        %782 = vmatprep.subr.bf16.mxu0 0
        %783 = vmatpush2.bf16.msra.mxu0 0
        %784 = vmatprep.mubr.bf16.mxu0 0
        %785 = vmatmul.mubr.bf16.gmra.mxu0 %v729
        %v786 = vpop.f32.mrf.mxu0
        %v787 = vadd.f32 %v614, %v786
        %v788 = vpop.f32.mrf.mxu0
        %v789 = vpop.f32.mrf.mxu0
        %v790 = vadd.f32 %v617, %v789
        %v791 = vpop.f32.mrf.mxu0
        %792 = vmatprep.mubr.bf16.mxu0 0
        %793 = vmatmul.mubr.bf16.gmra.mxu0 %v732
        %v794 = vpop.f32.mrf.mxu0
        %v795 = vadd.f32 %v622, %v794
        %v796 = vpop.f32.mrf.mxu0
        %v797 = vpop.f32.mrf.mxu0
        %v798 = vadd.f32 %v625, %v797
        %v799 = vpop.f32.mrf.mxu0
        %800 = vmatprep.mubr.bf16.mxu0 0
        %801 = vmatmul.mubr.bf16.gmra.mxu0 %v735
        %v802 = vpop.f32.mrf.mxu0
        %v803 = vadd.f32 %v630, %v802
        %v804 = vpop.f32.mrf.mxu0
        %v805 = vpop.f32.mrf.mxu0
        %v806 = vadd.f32 %v633, %v805
        %v807 = vpop.f32.mrf.mxu0
        %808 = vmatprep.mubr.bf16.mxu0 0
        %809 = vmatmul.mubr.bf16.gmra.mxu0 %v738
        %v810 = vpop.f32.mrf.mxu0
        %v811 = vadd.f32 %v638, %v810
        %v812 = vpop.f32.mrf.mxu0
        %v813 = vpop.f32.mrf.mxu0
        %v814 = vadd.f32 %v641, %v813
        %v815 = vpop.f32.mrf.mxu0
        %816 = vmatprep.mubr.bf16.mxu0 0
        %817 = vmatmul.mubr.bf16.gmra.mxu0 %v741
        %v818 = vpop.f32.mrf.mxu0
        %v819 = vadd.f32 %v646, %v818
        %v820 = vpop.f32.mrf.mxu0
        %v821 = vpop.f32.mrf.mxu0
        %v822 = vadd.f32 %v649, %v821
        %v823 = vpop.f32.mrf.mxu0
        %824 = vmatprep.mubr.bf16.mxu0 0
        %825 = vmatmul.mubr.bf16.gmra.mxu0 %v744
        %v826 = vpop.f32.mrf.mxu0
        %v827 = vadd.f32 %v654, %v826
        %v828 = vpop.f32.mrf.mxu0
        %v829 = vpop.f32.mrf.mxu0
        %v830 = vadd.f32 %v657, %v829
        %v831 = vpop.f32.mrf.mxu0
        %832 = vmatprep.mubr.bf16.mxu0 0
        %833 = vmatmul.mubr.bf16.gmra.mxu0 %v747
        %v834 = vpop.f32.mrf.mxu0
        %v835 = vadd.f32 %v662, %v834
        %v836 = vpop.f32.mrf.mxu0
        %v837 = vpop.f32.mrf.mxu0
        %v838 = vadd.f32 %v665, %v837
        %v839 = vpop.f32.mrf.mxu0
        %840 = vmatprep.mubr.bf16.mxu0 0
        %841 = vmatmul.mubr.bf16.gmra.mxu0 %v750
        %v842 = vpop.f32.mrf.mxu0
        %v843 = vadd.f32 %v670, %v842
        %v844 = vpop.f32.mrf.mxu0
        %v845 = vpop.f32.mrf.mxu0
        %v846 = vadd.f32 %v673, %v845
        %v847 = vpop.f32.mrf.mxu0
        %848 = vdwg.mxu0
        %vm857 = vcmask 1042432
        %vm858 = vcmask 1046532
        %vm859 = vmor %vm857, %vm858
        %v860 = vrot.slane %v290, 5
        %v861 = vrot.slane %v860, 4
        %v862 = vrot.slane %v291, 5
        %v863 = vsel %vm859, %v861, %v862
        %v864 = vrot.slane %v862, 4
        %v865 = vrot.slane %v292, 5
        %v866 = vsel %vm859, %v864, %v865
        %v867 = vrot.slane %v293, 5
        %v868 = vrot.slane %v867, 4
        %v869 = vrot.slane %v294, 5
        %v870 = vsel %vm859, %v868, %v869
        %v871 = vrot.slane %v869, 4
        %v872 = vrot.slane %v295, 5
        %v873 = vsel %vm859, %v871, %v872
        %v874 = vrot.slane %v296, 5
        %v875 = vrot.slane %v874, 4
        %v876 = vrot.slane %v297, 5
        %v877 = vsel %vm859, %v875, %v876
        %v878 = vrot.slane %v876, 4
        %v879 = vrot.slane %v298, 5
        %v880 = vsel %vm859, %v878, %v879
        %v881 = vrot.slane %v299, 5
        %v882 = vrot.slane %v881, 4
        %v883 = vrot.slane %v300, 5
        %v884 = vsel %vm859, %v882, %v883
        %v885 = vrot.slane %v883, 4
        %v886 = vrot.slane %v301, 5
        %v887 = vsel %vm859, %v885, %v886
        %v888 = vrot.slane %v302, 5
        %v889 = vrot.slane %v888, 4
        %v890 = vrot.slane %v303, 5
        %v891 = vsel %vm859, %v889, %v890
        %v892 = vrot.slane %v890, 4
        %v893 = vrot.slane %v304, 5
        %v894 = vsel %vm859, %v892, %v893
        %v895 = vrot.slane %v305, 5
        %v896 = vrot.slane %v895, 4
        %v897 = vrot.slane %v306, 5
        %v898 = vsel %vm859, %v896, %v897
        %v899 = vrot.slane %v897, 4
        %v900 = vrot.slane %v307, 5
        %v901 = vsel %vm859, %v899, %v900
        %v902 = vrot.slane %v308, 5
        %v903 = vrot.slane %v902, 4
        %v904 = vrot.slane %v309, 5
        %v905 = vsel %vm859, %v903, %v904
        %v906 = vrot.slane %v904, 4
        %v907 = vrot.slane %v310, 5
        %v908 = vsel %vm859, %v906, %v907
        %v909 = vrot.slane %v311, 5
        %v910 = vrot.slane %v909, 4
        %v911 = vrot.slane %v312, 5
        %v912 = vsel %vm859, %v910, %v911
        %v913 = vrot.slane %v911, 4
        %v914 = vrot.slane %v313, 5
        %v915 = vsel %vm859, %v913, %v914
        %s916 = scalar_lea.vmem [#allocation5], 32
        %v917 = vld [vmem:[%s916] sm:$0xf]
        %v918 = vld [vmem:[%s916 + $0x4] sm:$0xf]
        %v919 = vld [vmem:[%s916 + $0x8] sm:$0xf]
        %v920 = vld [vmem:[%s916 + $0xc] sm:$0xf]
        %v921 = vunpack.c.l.b16 %v863
        %v922 = vunpack.c.l.b16 %v866
        %v923 = vunpack.c.l.b16 %v870
        %v924 = vunpack.c.l.b16 %v873
        %v925 = vunpack.c.l.b16 %v877
        %v926 = vunpack.c.l.b16 %v880
        %v927 = vunpack.c.l.b16 %v884
        %v928 = vunpack.c.l.b16 %v887
        %v929 = vunpack.c.l.b16 %v891
        %v930 = vunpack.c.l.b16 %v894
        %v931 = vunpack.c.l.b16 %v898
        %v932 = vunpack.c.l.b16 %v901
        %v933 = vunpack.c.l.b16 %v905
        %v934 = vunpack.c.l.b16 %v908
        %v935 = vunpack.c.l.b16 %v912
        %v936 = vunpack.c.l.b16 %v915
        %v937 = vpack.c.b16 %v922, %v921
        %v938 = vpack.c.b16 %v924, %v923
        %v939 = vpack.c.b16 %v926, %v925
        %v940 = vpack.c.b16 %v928, %v927
        %v941 = vpack.c.b16 %v930, %v929
        %v942 = vpack.c.b16 %v932, %v931
        %v943 = vpack.c.b16 %v934, %v933
        %v944 = vpack.c.b16 %v936, %v935
        %v949 = vunpack.c.l.b16 %v917
        %v950 = vunpack.c.l.b16 %v918
        %v951 = vunpack.c.l.b16 %v919
        %v952 = vunpack.c.l.b16 %v920
        %v953 = vpack.c.b16 %v950, %v949
        %v954 = vpack.c.b16 %v952, %v951
        %v958 = vsel %vm554, %v937, 0
        %v961 = vsel %vm554, %v938, 0
        %v964 = vsel %vm554, %v939, 0
        %v967 = vsel %vm554, %v940, 0
        %v970 = vsel %vm554, %v941, 0
        %v973 = vsel %vm554, %v942, 0
        %v976 = vsel %vm554, %v943, 0
        %v979 = vsel %vm554, %v944, 0
        %981 = vmatprep.subr.bf16.mxu0 0
        %982 = vmatpush1.bf16.msra.mxu0 0
        %983 = vmatprep.subr.bf16.mxu0 0
        %984 = vmatpush1.bf16.msra.mxu0 0
        %985 = vmatprep.subr.bf16.mxu0 0
        %986 = vmatpush1.bf16.msra.mxu0 0
        %987 = vmatprep.subr.bf16.mxu0 0
        %988 = vmatpush1.bf16.msra.mxu0 0
        %989 = vmatprep.subr.bf16.mxu0 0
        %990 = vmatpush1.bf16.msra.mxu0 0
        %991 = vmatprep.subr.bf16.mxu0 0
        %992 = vmatpush1.bf16.msra.mxu0 0
        %993 = vmatprep.subr.bf16.mxu0 0
        %994 = vmatpush1.bf16.msra.mxu0 %v954
        %995 = vmatprep.subr.bf16.mxu0 0
        %996 = vmatpush1.bf16.msra.mxu0 %v953
        %997 = vmatprep.subr.bf16.mxu0 0
        %998 = vmatpush2.bf16.msra.mxu0 0
        %999 = vmatprep.subr.bf16.mxu0 0
        %1000 = vmatpush2.bf16.msra.mxu0 0
        %1001 = vmatprep.subr.bf16.mxu0 0
        %1002 = vmatpush2.bf16.msra.mxu0 0
        %1003 = vmatprep.subr.bf16.mxu0 0
        %1004 = vmatpush2.bf16.msra.mxu0 0
        %1005 = vmatprep.subr.bf16.mxu0 0
        %1006 = vmatpush2.bf16.msra.mxu0 0
        %1007 = vmatprep.subr.bf16.mxu0 0
        %1008 = vmatpush2.bf16.msra.mxu0 0
        %1009 = vmatprep.subr.bf16.mxu0 0
        %1010 = vmatpush2.bf16.msra.mxu0 0
        %1011 = vmatprep.subr.bf16.mxu0 0
        %1012 = vmatpush2.bf16.msra.mxu0 0
        %1013 = vmatprep.mubr.bf16.mxu0 0
        %1014 = vmatmul.mubr.bf16.gmra.mxu0 %v958
        %v1015 = vpop.f32.mrf.mxu0
        %v1016 = vadd.f32 0.0, %v1015
        %v1017 = vpop.f32.mrf.mxu0
        %v1018 = vpop.f32.mrf.mxu0
        %v1019 = vadd.f32 0.0, %v1018
        %v1020 = vpop.f32.mrf.mxu0
        %1021 = vmatprep.mubr.bf16.mxu0 0
        %1022 = vmatmul.mubr.bf16.gmra.mxu0 %v961
        %v1023 = vpop.f32.mrf.mxu0
        %v1024 = vadd.f32 0.0, %v1023
        %v1025 = vpop.f32.mrf.mxu0
        %v1026 = vpop.f32.mrf.mxu0
        %v1027 = vadd.f32 0.0, %v1026
        %v1028 = vpop.f32.mrf.mxu0
        %1029 = vmatprep.mubr.bf16.mxu0 0
        %1030 = vmatmul.mubr.bf16.gmra.mxu0 %v964
        %v1031 = vpop.f32.mrf.mxu0
        %v1032 = vadd.f32 0.0, %v1031
        %v1033 = vpop.f32.mrf.mxu0
        %v1034 = vpop.f32.mrf.mxu0
        %v1035 = vadd.f32 0.0, %v1034
        %v1036 = vpop.f32.mrf.mxu0
        %1037 = vmatprep.mubr.bf16.mxu0 0
        %1038 = vmatmul.mubr.bf16.gmra.mxu0 %v967
        %v1039 = vpop.f32.mrf.mxu0
        %v1040 = vadd.f32 0.0, %v1039
        %v1041 = vpop.f32.mrf.mxu0
        %v1042 = vpop.f32.mrf.mxu0
        %v1043 = vadd.f32 0.0, %v1042
        %v1044 = vpop.f32.mrf.mxu0
        %1045 = vmatprep.mubr.bf16.mxu0 0
        %1046 = vmatmul.mubr.bf16.gmra.mxu0 %v970
        %v1047 = vpop.f32.mrf.mxu0
        %v1048 = vadd.f32 0.0, %v1047
        %v1049 = vpop.f32.mrf.mxu0
        %v1050 = vpop.f32.mrf.mxu0
        %v1051 = vadd.f32 0.0, %v1050
        %v1052 = vpop.f32.mrf.mxu0
        %1053 = vmatprep.mubr.bf16.mxu0 0
        %1054 = vmatmul.mubr.bf16.gmra.mxu0 %v973
        %v1055 = vpop.f32.mrf.mxu0
        %v1056 = vadd.f32 0.0, %v1055
        %v1057 = vpop.f32.mrf.mxu0
        %v1058 = vpop.f32.mrf.mxu0
        %v1059 = vadd.f32 0.0, %v1058
        %v1060 = vpop.f32.mrf.mxu0
        %1061 = vmatprep.mubr.bf16.mxu0 0
        %1062 = vmatmul.mubr.bf16.gmra.mxu0 %v976
        %v1063 = vpop.f32.mrf.mxu0
        %v1064 = vadd.f32 0.0, %v1063
        %v1065 = vpop.f32.mrf.mxu0
        %v1066 = vpop.f32.mrf.mxu0
        %v1067 = vadd.f32 0.0, %v1066
        %v1068 = vpop.f32.mrf.mxu0
        %1069 = vmatprep.mubr.bf16.mxu0 0
        %1070 = vmatmul.mubr.bf16.gmra.mxu0 %v979
        %v1071 = vpop.f32.mrf.mxu0
        %v1072 = vadd.f32 0.0, %v1071
        %v1073 = vpop.f32.mrf.mxu0
        %v1074 = vpop.f32.mrf.mxu0
        %v1075 = vadd.f32 0.0, %v1074
        %v1076 = vpop.f32.mrf.mxu0
        %1077 = vdwg.mxu0
        %v1078 = vadd.f32 %v787, %v1016
        %v1079 = vadd.f32 %v790, %v1019
        %v1080 = vadd.f32 %v795, %v1024
        %v1081 = vadd.f32 %v798, %v1027
        %v1082 = vadd.f32 %v803, %v1032
        %v1083 = vadd.f32 %v806, %v1035
        %v1084 = vadd.f32 %v811, %v1040
        %v1085 = vadd.f32 %v814, %v1043
        %v1086 = vadd.f32 %v819, %v1048
        %v1087 = vadd.f32 %v822, %v1051
        %v1088 = vadd.f32 %v827, %v1056
        %v1089 = vadd.f32 %v830, %v1059
        %v1090 = vadd.f32 %v835, %v1064
        %v1091 = vadd.f32 %v838, %v1067
        %v1092 = vadd.f32 %v843, %v1072
        %v1093 = vadd.f32 %v846, %v1075
        %vm1094 = vsmask.f32 2304
        %vm1095 = vsmask.f32 6416
        %vm1096 = vmor %vm1094, %vm1095
        %v1097 = vrot.slane %v322, 5
        %v1098 = vrot.slane %v325, 6
        %v1099 = vor.u32 %v1097, %v1098
        %v1100 = vrot.slane %v1099, 4
        %v1101 = vrot.slane %v335, 5
        %v1102 = vrot.slane %v331, 6
        %v1103 = vor.u32 %v1101, %v1102
        %v1104 = vsel %vm1096, %v1100, %v1103
        %v1105 = vrot.slane %v1103, 4
        %v1106 = vshrl.u32 %v292, 16
        %v1108 = vrot.slane %v1106, 5
        %v1109 = vrot.slane %v341, 6
        %v1110 = vor.u32 %v1108, %v1109
        %v1111 = vsel %vm1096, %v1105, %v1110
        %v1112 = vrot.slane %v346, 5
        %v1113 = vrot.slane %v349, 6
        %v1114 = vor.u32 %v1112, %v1113
        %v1115 = vrot.slane %v1114, 4
        %v1116 = vrot.slane %v359, 5
        %v1117 = vrot.slane %v355, 6
        %v1118 = vor.u32 %v1116, %v1117
        %v1119 = vsel %vm1096, %v1115, %v1118
        %v1120 = vrot.slane %v1118, 4
        %v1121 = vshrl.u32 %v295, 16
        %v1123 = vrot.slane %v1121, 5
        %v1124 = vrot.slane %v365, 6
        %v1125 = vor.u32 %v1123, %v1124
        %v1126 = vsel %vm1096, %v1120, %v1125
        %v1127 = vrot.slane %v370, 5
        %v1128 = vrot.slane %v373, 6
        %v1129 = vor.u32 %v1127, %v1128
        %v1130 = vrot.slane %v1129, 4
        %v1131 = vrot.slane %v383, 5
        %v1132 = vrot.slane %v379, 6
        %v1133 = vor.u32 %v1131, %v1132
        %v1134 = vsel %vm1096, %v1130, %v1133
        %v1135 = vrot.slane %v1133, 4
        %v1136 = vshrl.u32 %v298, 16
        %v1138 = vrot.slane %v1136, 5
        %v1139 = vrot.slane %v389, 6
        %v1140 = vor.u32 %v1138, %v1139
        %v1141 = vsel %vm1096, %v1135, %v1140
        %v1142 = vrot.slane %v394, 5
        %v1143 = vrot.slane %v397, 6
        %v1144 = vor.u32 %v1142, %v1143
        %v1145 = vrot.slane %v1144, 4
        %v1146 = vrot.slane %v407, 5
        %v1147 = vrot.slane %v403, 6
        %v1148 = vor.u32 %v1146, %v1147
        %v1149 = vsel %vm1096, %v1145, %v1148
        %v1150 = vrot.slane %v1148, 4
        %v1151 = vshrl.u32 %v301, 16
        %v1153 = vrot.slane %v1151, 5
        %v1154 = vrot.slane %v413, 6
        %v1155 = vor.u32 %v1153, %v1154
        %v1156 = vsel %vm1096, %v1150, %v1155
        %v1157 = vrot.slane %v418, 5
        %v1158 = vrot.slane %v421, 6
        %v1159 = vor.u32 %v1157, %v1158
        %v1160 = vrot.slane %v1159, 4
        %v1161 = vrot.slane %v431, 5
        %v1162 = vrot.slane %v427, 6
        %v1163 = vor.u32 %v1161, %v1162
        %v1164 = vsel %vm1096, %v1160, %v1163
        %v1165 = vrot.slane %v1163, 4
        %v1166 = vshrl.u32 %v304, 16
        %v1168 = vrot.slane %v1166, 5
        %v1169 = vrot.slane %v437, 6
        %v1170 = vor.u32 %v1168, %v1169
        %v1171 = vsel %vm1096, %v1165, %v1170
        %v1172 = vrot.slane %v442, 5
        %v1173 = vrot.slane %v445, 6
        %v1174 = vor.u32 %v1172, %v1173
        %v1175 = vrot.slane %v1174, 4
        %v1176 = vrot.slane %v455, 5
        %v1177 = vrot.slane %v451, 6
        %v1178 = vor.u32 %v1176, %v1177
        %v1179 = vsel %vm1096, %v1175, %v1178
        %v1180 = vrot.slane %v1178, 4
        %v1181 = vshrl.u32 %v307, 16
        %v1183 = vrot.slane %v1181, 5
        %v1184 = vrot.slane %v461, 6
        %v1185 = vor.u32 %v1183, %v1184
        %v1186 = vsel %vm1096, %v1180, %v1185
        %v1187 = vrot.slane %v466, 5
        %v1188 = vrot.slane %v469, 6
        %v1189 = vor.u32 %v1187, %v1188
        %v1190 = vrot.slane %v1189, 4
        %v1191 = vrot.slane %v479, 5
        %v1192 = vrot.slane %v475, 6
        %v1193 = vor.u32 %v1191, %v1192
        %v1194 = vsel %vm1096, %v1190, %v1193
        %v1195 = vrot.slane %v1193, 4
        %v1196 = vshrl.u32 %v310, 16
        %v1198 = vrot.slane %v1196, 5
        %v1199 = vrot.slane %v485, 6
        %v1200 = vor.u32 %v1198, %v1199
        %v1201 = vsel %vm1096, %v1195, %v1200
        %v1202 = vrot.slane %v490, 5
        %v1203 = vrot.slane %v493, 6
        %v1204 = vor.u32 %v1202, %v1203
        %v1205 = vrot.slane %v1204, 4
        %v1206 = vrot.slane %v503, 5
        %v1207 = vrot.slane %v499, 6
        %v1208 = vor.u32 %v1206, %v1207
        %v1209 = vsel %vm1096, %v1205, %v1208
        %v1210 = vrot.slane %v1208, 4
        %v1211 = vshrl.u32 %v313, 16
        %v1213 = vrot.slane %v1211, 5
        %v1214 = vrot.slane %v509, 6
        %v1215 = vor.u32 %v1213, %v1214
        %v1216 = vsel %vm1096, %v1210, %v1215
        %s1217 = scalar_lea.vmem [#allocation5], 48
        %v1218 = vld [vmem:[%s1217] sm:$0xf]
        %v1219 = vld [vmem:[%s1217 + $0x4] sm:$0xf]
        %v1220 = vld [vmem:[%s1217 + $0x8] sm:$0xf]
        %v1221 = vld [vmem:[%s1217 + $0xc] sm:$0xf]
        %v1222 = vunpack.c.l.b16 %v1104
        %v1223 = vunpack.c.l.b16 %v1111
        %v1224 = vunpack.c.l.b16 %v1119
        %v1225 = vunpack.c.l.b16 %v1126
        %v1226 = vunpack.c.l.b16 %v1134
        %v1227 = vunpack.c.l.b16 %v1141
        %v1228 = vunpack.c.l.b16 %v1149
        %v1229 = vunpack.c.l.b16 %v1156
        %v1230 = vunpack.c.l.b16 %v1164
        %v1231 = vunpack.c.l.b16 %v1171
        %v1232 = vunpack.c.l.b16 %v1179
        %v1233 = vunpack.c.l.b16 %v1186
        %v1234 = vunpack.c.l.b16 %v1194
        %v1235 = vunpack.c.l.b16 %v1201
        %v1236 = vunpack.c.l.b16 %v1209
        %v1237 = vunpack.c.l.b16 %v1216
        %v1238 = vpack.c.b16 %v1223, %v1222
        %v1239 = vpack.c.b16 %v1225, %v1224
        %v1240 = vpack.c.b16 %v1227, %v1226
        %v1241 = vpack.c.b16 %v1229, %v1228
        %v1242 = vpack.c.b16 %v1231, %v1230
        %v1243 = vpack.c.b16 %v1233, %v1232
        %v1244 = vpack.c.b16 %v1235, %v1234
        %v1245 = vpack.c.b16 %v1237, %v1236
        %v1250 = vunpack.c.l.b16 %v1218
        %v1251 = vunpack.c.l.b16 %v1219
        %v1252 = vunpack.c.l.b16 %v1220
        %v1253 = vunpack.c.l.b16 %v1221
        %v1254 = vpack.c.b16 %v1251, %v1250
        %v1255 = vpack.c.b16 %v1253, %v1252
        %v1259 = vsel %vm554, %v1238, 0
        %v1262 = vsel %vm554, %v1239, 0
        %v1265 = vsel %vm554, %v1240, 0
        %v1268 = vsel %vm554, %v1241, 0
        %v1271 = vsel %vm554, %v1242, 0
        %v1274 = vsel %vm554, %v1243, 0
        %v1277 = vsel %vm554, %v1244, 0
        %v1280 = vsel %vm554, %v1245, 0
        %1282 = vmatprep.subr.bf16.mxu0 0
        %1283 = vmatpush1.bf16.msra.mxu0 0
        %1284 = vmatprep.subr.bf16.mxu0 0
        %1285 = vmatpush1.bf16.msra.mxu0 0
        %1286 = vmatprep.subr.bf16.mxu0 0
        %1287 = vmatpush1.bf16.msra.mxu0 0
        %1288 = vmatprep.subr.bf16.mxu0 0
        %1289 = vmatpush1.bf16.msra.mxu0 0
        %1290 = vmatprep.subr.bf16.mxu0 0
        %1291 = vmatpush1.bf16.msra.mxu0 0
        %1292 = vmatprep.subr.bf16.mxu0 0
        %1293 = vmatpush1.bf16.msra.mxu0 0
        %1294 = vmatprep.subr.bf16.mxu0 0
        %1295 = vmatpush1.bf16.msra.mxu0 %v1255
        %1296 = vmatprep.subr.bf16.mxu0 0
        %1297 = vmatpush1.bf16.msra.mxu0 %v1254
        %1298 = vmatprep.subr.bf16.mxu0 0
        %1299 = vmatpush2.bf16.msra.mxu0 0
        %1300 = vmatprep.subr.bf16.mxu0 0
        %1301 = vmatpush2.bf16.msra.mxu0 0
        %1302 = vmatprep.subr.bf16.mxu0 0
        %1303 = vmatpush2.bf16.msra.mxu0 0
        %1304 = vmatprep.subr.bf16.mxu0 0
        %1305 = vmatpush2.bf16.msra.mxu0 0
        %1306 = vmatprep.subr.bf16.mxu0 0
        %1307 = vmatpush2.bf16.msra.mxu0 0
        %1308 = vmatprep.subr.bf16.mxu0 0
        %1309 = vmatpush2.bf16.msra.mxu0 0
        %1310 = vmatprep.subr.bf16.mxu0 0
        %1311 = vmatpush2.bf16.msra.mxu0 0
        %1312 = vmatprep.subr.bf16.mxu0 0
        %1313 = vmatpush2.bf16.msra.mxu0 0
        %1314 = vmatprep.mubr.bf16.mxu0 0
        %1315 = vmatmul.mubr.bf16.gmra.mxu0 %v1259
        %v1316 = vpop.f32.mrf.mxu0
        %v1317 = vadd.f32 0.0, %v1316
        %v1318 = vpop.f32.mrf.mxu0
        %v1319 = vpop.f32.mrf.mxu0
        %v1320 = vadd.f32 0.0, %v1319
        %v1321 = vpop.f32.mrf.mxu0
        %1322 = vmatprep.mubr.bf16.mxu0 0
        %1323 = vmatmul.mubr.bf16.gmra.mxu0 %v1262
        %v1324 = vpop.f32.mrf.mxu0
        %v1325 = vadd.f32 0.0, %v1324
        %v1326 = vpop.f32.mrf.mxu0
        %v1327 = vpop.f32.mrf.mxu0
        %v1328 = vadd.f32 0.0, %v1327
        %v1329 = vpop.f32.mrf.mxu0
        %1330 = vmatprep.mubr.bf16.mxu0 0
        %1331 = vmatmul.mubr.bf16.gmra.mxu0 %v1265
        %v1332 = vpop.f32.mrf.mxu0
        %v1333 = vadd.f32 0.0, %v1332
        %v1334 = vpop.f32.mrf.mxu0
        %v1335 = vpop.f32.mrf.mxu0
        %v1336 = vadd.f32 0.0, %v1335
        %v1337 = vpop.f32.mrf.mxu0
        %1338 = vmatprep.mubr.bf16.mxu0 0
        %1339 = vmatmul.mubr.bf16.gmra.mxu0 %v1268
        %v1340 = vpop.f32.mrf.mxu0
        %v1341 = vadd.f32 0.0, %v1340
        %v1342 = vpop.f32.mrf.mxu0
        %v1343 = vpop.f32.mrf.mxu0
        %v1344 = vadd.f32 0.0, %v1343
        %v1345 = vpop.f32.mrf.mxu0
        %1346 = vmatprep.mubr.bf16.mxu0 0
        %1347 = vmatmul.mubr.bf16.gmra.mxu0 %v1271
        %v1348 = vpop.f32.mrf.mxu0
        %v1349 = vadd.f32 0.0, %v1348
        %v1350 = vpop.f32.mrf.mxu0
        %v1351 = vpop.f32.mrf.mxu0
        %v1352 = vadd.f32 0.0, %v1351
        %v1353 = vpop.f32.mrf.mxu0
        %1354 = vmatprep.mubr.bf16.mxu0 0
        %1355 = vmatmul.mubr.bf16.gmra.mxu0 %v1274
        %v1356 = vpop.f32.mrf.mxu0
        %v1357 = vadd.f32 0.0, %v1356
        %v1358 = vpop.f32.mrf.mxu0
        %v1359 = vpop.f32.mrf.mxu0
        %v1360 = vadd.f32 0.0, %v1359
        %v1361 = vpop.f32.mrf.mxu0
        %1362 = vmatprep.mubr.bf16.mxu0 0
        %1363 = vmatmul.mubr.bf16.gmra.mxu0 %v1277
        %v1364 = vpop.f32.mrf.mxu0
        %v1365 = vadd.f32 0.0, %v1364
        %v1366 = vpop.f32.mrf.mxu0
        %v1367 = vpop.f32.mrf.mxu0
        %v1368 = vadd.f32 0.0, %v1367
        %v1369 = vpop.f32.mrf.mxu0
        %1370 = vmatprep.mubr.bf16.mxu0 0
        %1371 = vmatmul.mubr.bf16.gmra.mxu0 %v1280
        %v1372 = vpop.f32.mrf.mxu0
        %v1373 = vadd.f32 0.0, %v1372
        %v1374 = vpop.f32.mrf.mxu0
        %v1375 = vpop.f32.mrf.mxu0
        %v1376 = vadd.f32 0.0, %v1375
        %v1377 = vpop.f32.mrf.mxu0
        %1378 = vdwg.mxu0
        %v1379 = vadd.f32 %v1078, %v1317
        %v1380 = vadd.f32 %v1079, %v1320
        %v1381 = vadd.f32 %v1080, %v1325
        %v1382 = vadd.f32 %v1081, %v1328
        %v1383 = vadd.f32 %v1082, %v1333
        %v1384 = vadd.f32 %v1083, %v1336
        %v1385 = vadd.f32 %v1084, %v1341
        %v1386 = vadd.f32 %v1085, %v1344
        %v1387 = vadd.f32 %v1086, %v1349
        %v1388 = vadd.f32 %v1087, %v1352
        %v1389 = vadd.f32 %v1088, %v1357
        %v1390 = vadd.f32 %v1089, %v1360
        %v1391 = vadd.f32 %v1090, %v1365
        %v1392 = vadd.f32 %v1091, %v1368
        %v1393 = vadd.f32 %v1092, %v1373
        %v1394 = vadd.f32 %v1093, %v1376
        %vm1395 = vcmask 1041408
        %vm1396 = vcmask 1045508
        %vm1397 = vmor %vm1395, %vm1396
        %v1398 = vrot.slane %v290, 6
        %v1399 = vrot.slane %v1398, 4
        %v1400 = vrot.slane %v291, 6
        %v1401 = vsel %vm1397, %v1399, %v1400
        %v1402 = vrot.slane %v1400, 4
        %v1403 = vrot.slane %v292, 6
        %v1404 = vsel %vm1397, %v1402, %v1403
        %v1405 = vrot.slane %v293, 6
        %v1406 = vrot.slane %v1405, 4
        %v1407 = vrot.slane %v294, 6
        %v1408 = vsel %vm1397, %v1406, %v1407
        %v1409 = vrot.slane %v1407, 4
        %v1410 = vrot.slane %v295, 6
        %v1411 = vsel %vm1397, %v1409, %v1410
        %v1412 = vrot.slane %v296, 6
        %v1413 = vrot.slane %v1412, 4
        %v1414 = vrot.slane %v297, 6
        %v1415 = vsel %vm1397, %v1413, %v1414
        %v1416 = vrot.slane %v1414, 4
        %v1417 = vrot.slane %v298, 6
        %v1418 = vsel %vm1397, %v1416, %v1417
        %v1419 = vrot.slane %v299, 6
        %v1420 = vrot.slane %v1419, 4
        %v1421 = vrot.slane %v300, 6
        %v1422 = vsel %vm1397, %v1420, %v1421
        %v1423 = vrot.slane %v1421, 4
        %v1424 = vrot.slane %v301, 6
        %v1425 = vsel %vm1397, %v1423, %v1424
        %v1426 = vrot.slane %v302, 6
        %v1427 = vrot.slane %v1426, 4
        %v1428 = vrot.slane %v303, 6
        %v1429 = vsel %vm1397, %v1427, %v1428
        %v1430 = vrot.slane %v1428, 4
        %v1431 = vrot.slane %v304, 6
        %v1432 = vsel %vm1397, %v1430, %v1431
        %v1433 = vrot.slane %v305, 6
        %v1434 = vrot.slane %v1433, 4
        %v1435 = vrot.slane %v306, 6
        %v1436 = vsel %vm1397, %v1434, %v1435
        %v1437 = vrot.slane %v1435, 4
        %v1438 = vrot.slane %v307, 6
        %v1439 = vsel %vm1397, %v1437, %v1438
        %v1440 = vrot.slane %v308, 6
        %v1441 = vrot.slane %v1440, 4
        %v1442 = vrot.slane %v309, 6
        %v1443 = vsel %vm1397, %v1441, %v1442
        %v1444 = vrot.slane %v1442, 4
        %v1445 = vrot.slane %v310, 6
        %v1446 = vsel %vm1397, %v1444, %v1445
        %v1447 = vrot.slane %v311, 6
        %v1448 = vrot.slane %v1447, 4
        %v1449 = vrot.slane %v312, 6
        %v1450 = vsel %vm1397, %v1448, %v1449
        %v1451 = vrot.slane %v1449, 4
        %v1452 = vrot.slane %v313, 6
        %v1453 = vsel %vm1397, %v1451, %v1452
        %s1454 = scalar_lea.vmem [#allocation5], 64
        %v1455 = vld [vmem:[%s1454] sm:$0xf]
        %v1456 = vld [vmem:[%s1454 + $0x4] sm:$0xf]
        %v1457 = vld [vmem:[%s1454 + $0x8] sm:$0xf]
        %v1458 = vld [vmem:[%s1454 + $0xc] sm:$0xf]
        %v1459 = vunpack.c.l.b16 %v1401
        %v1460 = vunpack.c.l.b16 %v1404
        %v1461 = vunpack.c.l.b16 %v1408
        %v1462 = vunpack.c.l.b16 %v1411
        %v1463 = vunpack.c.l.b16 %v1415
        %v1464 = vunpack.c.l.b16 %v1418
        %v1465 = vunpack.c.l.b16 %v1422
        %v1466 = vunpack.c.l.b16 %v1425
        %v1467 = vunpack.c.l.b16 %v1429
        %v1468 = vunpack.c.l.b16 %v1432
        %v1469 = vunpack.c.l.b16 %v1436
        %v1470 = vunpack.c.l.b16 %v1439
        %v1471 = vunpack.c.l.b16 %v1443
        %v1472 = vunpack.c.l.b16 %v1446
        %v1473 = vunpack.c.l.b16 %v1450
        %v1474 = vunpack.c.l.b16 %v1453
        %v1475 = vpack.c.b16 %v1460, %v1459
        %v1476 = vpack.c.b16 %v1462, %v1461
        %v1477 = vpack.c.b16 %v1464, %v1463
        %v1478 = vpack.c.b16 %v1466, %v1465
        %v1479 = vpack.c.b16 %v1468, %v1467
        %v1480 = vpack.c.b16 %v1470, %v1469
        %v1481 = vpack.c.b16 %v1472, %v1471
        %v1482 = vpack.c.b16 %v1474, %v1473
        %v1487 = vunpack.c.l.b16 %v1455
        %v1488 = vunpack.c.l.b16 %v1456
        %v1489 = vunpack.c.l.b16 %v1457
        %v1490 = vunpack.c.l.b16 %v1458
        %v1491 = vpack.c.b16 %v1488, %v1487
        %v1492 = vpack.c.b16 %v1490, %v1489
        %v1496 = vsel %vm554, %v1475, 0
        %v1499 = vsel %vm554, %v1476, 0
        %v1502 = vsel %vm554, %v1477, 0
        %v1505 = vsel %vm554, %v1478, 0
        %v1508 = vsel %vm554, %v1479, 0
        %v1511 = vsel %vm554, %v1480, 0
        %v1514 = vsel %vm554, %v1481, 0
        %v1517 = vsel %vm554, %v1482, 0
        %1519 = vmatprep.subr.bf16.mxu0 0
        %1520 = vmatpush1.bf16.msra.mxu0 0
        %1521 = vmatprep.subr.bf16.mxu0 0
        %1522 = vmatpush1.bf16.msra.mxu0 0
        %1523 = vmatprep.subr.bf16.mxu0 0
        %1524 = vmatpush1.bf16.msra.mxu0 0
        %1525 = vmatprep.subr.bf16.mxu0 0
        %1526 = vmatpush1.bf16.msra.mxu0 0
        %1527 = vmatprep.subr.bf16.mxu0 0
        %1528 = vmatpush1.bf16.msra.mxu0 0
        %1529 = vmatprep.subr.bf16.mxu0 0
        %1530 = vmatpush1.bf16.msra.mxu0 0
        %1531 = vmatprep.subr.bf16.mxu0 0
        %1532 = vmatpush1.bf16.msra.mxu0 %v1492
        %1533 = vmatprep.subr.bf16.mxu0 0
        %1534 = vmatpush1.bf16.msra.mxu0 %v1491
        %1535 = vmatprep.subr.bf16.mxu0 0
        %1536 = vmatpush2.bf16.msra.mxu0 0
        %1537 = vmatprep.subr.bf16.mxu0 0
        %1538 = vmatpush2.bf16.msra.mxu0 0
        %1539 = vmatprep.subr.bf16.mxu0 0
        %1540 = vmatpush2.bf16.msra.mxu0 0
        %1541 = vmatprep.subr.bf16.mxu0 0
        %1542 = vmatpush2.bf16.msra.mxu0 0
        %1543 = vmatprep.subr.bf16.mxu0 0
        %1544 = vmatpush2.bf16.msra.mxu0 0
        %1545 = vmatprep.subr.bf16.mxu0 0
        %1546 = vmatpush2.bf16.msra.mxu0 0
        %1547 = vmatprep.subr.bf16.mxu0 0
        %1548 = vmatpush2.bf16.msra.mxu0 0
        %1549 = vmatprep.subr.bf16.mxu0 0
        %1550 = vmatpush2.bf16.msra.mxu0 0
        %1551 = vmatprep.mubr.bf16.mxu0 0
        %1552 = vmatmul.mubr.bf16.gmra.mxu0 %v1496
        %v1553 = vpop.f32.mrf.mxu0
        %v1554 = vadd.f32 0.0, %v1553
        %v1555 = vpop.f32.mrf.mxu0
        %v1556 = vpop.f32.mrf.mxu0
        %v1557 = vadd.f32 0.0, %v1556
        %v1558 = vpop.f32.mrf.mxu0
        %1559 = vmatprep.mubr.bf16.mxu0 0
        %1560 = vmatmul.mubr.bf16.gmra.mxu0 %v1499
        %v1561 = vpop.f32.mrf.mxu0
        %v1562 = vadd.f32 0.0, %v1561
        %v1563 = vpop.f32.mrf.mxu0
        %v1564 = vpop.f32.mrf.mxu0
        %v1565 = vadd.f32 0.0, %v1564
        %v1566 = vpop.f32.mrf.mxu0
        %1567 = vmatprep.mubr.bf16.mxu0 0
        %1568 = vmatmul.mubr.bf16.gmra.mxu0 %v1502
        %v1569 = vpop.f32.mrf.mxu0
        %v1570 = vadd.f32 0.0, %v1569
        %v1571 = vpop.f32.mrf.mxu0
        %v1572 = vpop.f32.mrf.mxu0
        %v1573 = vadd.f32 0.0, %v1572
        %v1574 = vpop.f32.mrf.mxu0
        %1575 = vmatprep.mubr.bf16.mxu0 0
        %1576 = vmatmul.mubr.bf16.gmra.mxu0 %v1505
        %v1577 = vpop.f32.mrf.mxu0
        %v1578 = vadd.f32 0.0, %v1577
        %v1579 = vpop.f32.mrf.mxu0
        %v1580 = vpop.f32.mrf.mxu0
        %v1581 = vadd.f32 0.0, %v1580
        %v1582 = vpop.f32.mrf.mxu0
        %1583 = vmatprep.mubr.bf16.mxu0 0
        %1584 = vmatmul.mubr.bf16.gmra.mxu0 %v1508
        %v1585 = vpop.f32.mrf.mxu0
        %v1586 = vadd.f32 0.0, %v1585
        %v1587 = vpop.f32.mrf.mxu0
        %v1588 = vpop.f32.mrf.mxu0
        %v1589 = vadd.f32 0.0, %v1588
        %v1590 = vpop.f32.mrf.mxu0
        %1591 = vmatprep.mubr.bf16.mxu0 0
        %1592 = vmatmul.mubr.bf16.gmra.mxu0 %v1511
        %v1593 = vpop.f32.mrf.mxu0
        %v1594 = vadd.f32 0.0, %v1593
        %v1595 = vpop.f32.mrf.mxu0
        %v1596 = vpop.f32.mrf.mxu0
        %v1597 = vadd.f32 0.0, %v1596
        %v1598 = vpop.f32.mrf.mxu0
        %1599 = vmatprep.mubr.bf16.mxu0 0
        %1600 = vmatmul.mubr.bf16.gmra.mxu0 %v1514
        %v1601 = vpop.f32.mrf.mxu0
        %v1602 = vadd.f32 0.0, %v1601
        %v1603 = vpop.f32.mrf.mxu0
        %v1604 = vpop.f32.mrf.mxu0
        %v1605 = vadd.f32 0.0, %v1604
        %v1606 = vpop.f32.mrf.mxu0
        %1607 = vmatprep.mubr.bf16.mxu0 0
        %1608 = vmatmul.mubr.bf16.gmra.mxu0 %v1517
        %v1609 = vpop.f32.mrf.mxu0
        %v1610 = vadd.f32 0.0, %v1609
        %v1611 = vpop.f32.mrf.mxu0
        %v1612 = vpop.f32.mrf.mxu0
        %v1613 = vadd.f32 0.0, %v1612
        %v1614 = vpop.f32.mrf.mxu0
        %1615 = vdwg.mxu0
        %v1616 = vadd.f32 %v1379, %v1554
        %v1617 = vadd.f32 %v1380, %v1557
        %v1618 = vadd.f32 %v1381, %v1562
        %v1619 = vadd.f32 %v1382, %v1565
        %v1620 = vadd.f32 %v1383, %v1570
        %v1621 = vadd.f32 %v1384, %v1573
        %v1622 = vadd.f32 %v1385, %v1578
        %v1623 = vadd.f32 %v1386, %v1581
        %v1624 = vadd.f32 %v1387, %v1586
        %v1625 = vadd.f32 %v1388, %v1589
        %v1626 = vadd.f32 %v1389, %v1594
        %v1627 = vadd.f32 %v1390, %v1597
        %v1628 = vadd.f32 %v1391, %v1602
        %v1629 = vadd.f32 %v1392, %v1605
        %v1630 = vadd.f32 %v1393, %v1610
        %v1631 = vadd.f32 %v1394, %v1613
        %v1632 = vld [vmem:[#allocation7] sm:$0xff]
        %v1633 = vld [vmem:[#allocation7 + $0x8] sm:$0xff]
        %v1634 = vadd.f32 %v1616, %v1632
        %v1635 = vadd.f32 %v1617, %v1633
        %v1636 = vadd.f32 %v1618, %v1632
        %v1637 = vadd.f32 %v1619, %v1633
        %v1638 = vadd.f32 %v1620, %v1632
        %v1639 = vadd.f32 %v1621, %v1633
        %v1640 = vadd.f32 %v1622, %v1632
        %v1641 = vadd.f32 %v1623, %v1633
        %v1642 = vadd.f32 %v1624, %v1632
        %v1643 = vadd.f32 %v1625, %v1633
        %v1644 = vadd.f32 %v1626, %v1632
        %v1645 = vadd.f32 %v1627, %v1633
        %v1646 = vadd.f32 %v1628, %v1632
        %v1647 = vadd.f32 %v1629, %v1633
        %v1648 = vadd.f32 %v1630, %v1632
        %v1649 = vadd.f32 %v1631, %v1633
        %v1650 = vmax.f32 %v1634, %v1635
        %v1651 = vrot.slane %v1650, 4
        %v1652 = vmax.f32 %v1650, %v1651
        %v1653 = vrot.slane %v1652, 2
        %v1654 = vmax.f32 %v1652, %v1653
        %v1655 = vrot.slane %v1654, 1
        %v1656 = vmax.f32 %v1654, %v1655
        %v1657 = vmax.f32 %v1636, %v1637
        %v1658 = vrot.slane %v1657, 4
        %v1659 = vmax.f32 %v1657, %v1658
        %v1660 = vrot.slane %v1659, 2
        %v1661 = vmax.f32 %v1659, %v1660
        %v1662 = vrot.slane %v1661, 1
        %v1663 = vmax.f32 %v1661, %v1662
        %v1664 = vmax.f32 %v1638, %v1639
        %v1665 = vrot.slane %v1664, 4
        %v1666 = vmax.f32 %v1664, %v1665
        %v1667 = vrot.slane %v1666, 2
        %v1668 = vmax.f32 %v1666, %v1667
        %v1669 = vrot.slane %v1668, 1
        %v1670 = vmax.f32 %v1668, %v1669
        %v1671 = vmax.f32 %v1640, %v1641
        %v1672 = vrot.slane %v1671, 4
        %v1673 = vmax.f32 %v1671, %v1672
        %v1674 = vrot.slane %v1673, 2
        %v1675 = vmax.f32 %v1673, %v1674
        %v1676 = vrot.slane %v1675, 1
        %v1677 = vmax.f32 %v1675, %v1676
        %v1678 = vmax.f32 %v1642, %v1643
        %v1679 = vrot.slane %v1678, 4
        %v1680 = vmax.f32 %v1678, %v1679
        %v1681 = vrot.slane %v1680, 2
        %v1682 = vmax.f32 %v1680, %v1681
        %v1683 = vrot.slane %v1682, 1
        %v1684 = vmax.f32 %v1682, %v1683
        %v1685 = vmax.f32 %v1644, %v1645
        %v1686 = vrot.slane %v1685, 4
        %v1687 = vmax.f32 %v1685, %v1686
        %v1688 = vrot.slane %v1687, 2
        %v1689 = vmax.f32 %v1687, %v1688
        %v1690 = vrot.slane %v1689, 1
        %v1691 = vmax.f32 %v1689, %v1690
        %v1692 = vmax.f32 %v1646, %v1647
        %v1693 = vrot.slane %v1692, 4
        %v1694 = vmax.f32 %v1692, %v1693
        %v1695 = vrot.slane %v1694, 2
        %v1696 = vmax.f32 %v1694, %v1695
        %v1697 = vrot.slane %v1696, 1
        %v1698 = vmax.f32 %v1696, %v1697
        %v1699 = vmax.f32 %v1648, %v1649
        %v1700 = vrot.slane %v1699, 4
        %v1701 = vmax.f32 %v1699, %v1700
        %v1702 = vrot.slane %v1701, 2
        %v1703 = vmax.f32 %v1701, %v1702
        %v1704 = vrot.slane %v1703, 1
        %v1705 = vmax.f32 %v1703, %v1704
        %v1706 = vmax.f32 %v1656, 0.0
        %v1707 = vmax.f32 %v1663, 0.0
        %v1708 = vmax.f32 %v1670, 0.0
        %v1709 = vmax.f32 %v1677, 0.0
        %v1710 = vmax.f32 %v1684, 0.0
        %v1711 = vmax.f32 %v1691, 0.0
        %v1712 = vmax.f32 %v1698, 0.0
        %v1713 = vmax.f32 %v1705, 0.0
        %v1714 = vld [vmem:[#allocation8] sm:$0xff]
        %v1715 = vld [vmem:[#allocation8 + $0x8] sm:$0xff]
        %v1716 = vld [vmem:[#allocation8 + $0x10] sm:$0xff]
        %v1717 = vld [vmem:[#allocation8 + $0x18] sm:$0xff]
        %v1718 = vld [vmem:[#allocation8 + $0x20] sm:$0xff]
        %v1719 = vld [vmem:[#allocation8 + $0x28] sm:$0xff]
        %v1720 = vld [vmem:[#allocation8 + $0x30] sm:$0xff]
        %v1721 = vld [vmem:[#allocation8 + $0x38] sm:$0xff]
        %v1722 = vld [vmem:[#allocation8 + $0x40] sm:$0xff]
        %v1723 = vld [vmem:[#allocation8 + $0x48] sm:$0xff]
        %v1724 = vld [vmem:[#allocation8 + $0x50] sm:$0xff]
        %v1725 = vld [vmem:[#allocation8 + $0x58] sm:$0xff]
        %v1726 = vld [vmem:[#allocation8 + $0x60] sm:$0xff]
        %v1727 = vld [vmem:[#allocation8 + $0x68] sm:$0xff]
        %v1728 = vld [vmem:[#allocation8 + $0x70] sm:$0xff]
        %v1729 = vld [vmem:[#allocation8 + $0x78] sm:$0xff]
        %v1730 = vld [vmem:[%s4] sm:$0x1]
        %v1732 = vlaneseq
        %v1733 = vshrl.u32 %v1732, 7
        %v1734 = vsub.s32 0, %v1733
        %v1735 = vrot.slane %v1730, %v1734
        %vm1745 = vcmask 1041409
        %v1746 = vsel %vm1745, %v1707, %v1706
        %vm1747 = vcmask 1042434
        %v1748 = vsel %vm1747, %v1708, %v1746
        %vm1749 = vcmask 1043459
        %v1750 = vsel %vm1749, %v1709, %v1748
        %vm1751 = vcmask 1044484
        %v1752 = vsel %vm1751, %v1710, %v1750
        %vm1753 = vcmask 1045509
        %v1754 = vsel %vm1753, %v1711, %v1752
        %vm1755 = vcmask 1046534
        %v1756 = vsel %vm1755, %v1712, %v1754
        %vm1757 = vcmask 1047559
        %v1758 = vsel %vm1757, %v1713, %v1756
        %1760 = vmatprep.subr.mxu0 0.0
        %1761 = vmatpush1.msra.mxu0 %v1729
        %1762 = vmatprep.subr.mxu0 0.0
        %1763 = vmatpush1.msra.mxu0 %v1728
        %1764 = vmatprep.subr.mxu0 0.0
        %1765 = vmatpush1.msra.mxu0 %v1727
        %1766 = vmatprep.subr.mxu0 0.0
        %1767 = vmatpush1.msra.mxu0 %v1726
        %1768 = vmatprep.subr.mxu0 0.0
        %1769 = vmatpush1.msra.mxu0 %v1725
        %1770 = vmatprep.subr.mxu0 0.0
        %1771 = vmatpush1.msra.mxu0 %v1724
        %1772 = vmatprep.subr.mxu0 0.0
        %1773 = vmatpush1.msra.mxu0 %v1723
        %1774 = vmatprep.subr.mxu0 0.0
        %1775 = vmatpush1.msra.mxu0 %v1722
        %1776 = vmatprep.subr.mxu0 0.0
        %1777 = vmatpush1.msra.mxu0 %v1721
        %1778 = vmatprep.subr.mxu0 0.0
        %1779 = vmatpush1.msra.mxu0 %v1720
        %1780 = vmatprep.subr.mxu0 0.0
        %1781 = vmatpush1.msra.mxu0 %v1719
        %1782 = vmatprep.subr.mxu0 0.0
        %1783 = vmatpush1.msra.mxu0 %v1718
        %1784 = vmatprep.subr.mxu0 0.0
        %1785 = vmatpush1.msra.mxu0 %v1717
        %1786 = vmatprep.subr.mxu0 0.0
        %1787 = vmatpush1.msra.mxu0 %v1716
        %1788 = vmatprep.subr.mxu0 0.0
        %1789 = vmatpush1.msra.mxu0 %v1715
        %1790 = vmatprep.subr.mxu0 0.0
        %1791 = vmatpush1.msra.mxu0 %v1714
        %1792 = vmatprep.subr.mxu0 0.0
        %1793 = vmatpush2.msra.mxu0 0.0
        %1794 = vmatprep.subr.mxu0 0.0
        %1795 = vmatpush2.msra.mxu0 0.0
        %1796 = vmatprep.subr.mxu0 0.0
        %1797 = vmatpush2.msra.mxu0 0.0
        %1798 = vmatprep.subr.mxu0 0.0
        %1799 = vmatpush2.msra.mxu0 0.0
        %1800 = vmatprep.subr.mxu0 0.0
        %1801 = vmatpush2.msra.mxu0 0.0
        %1802 = vmatprep.subr.mxu0 0.0
        %1803 = vmatpush2.msra.mxu0 0.0
        %1804 = vmatprep.subr.mxu0 0.0
        %1805 = vmatpush2.msra.mxu0 0.0
        %1806 = vmatprep.subr.mxu0 0.0
        %1807 = vmatpush2.msra.mxu0 0.0
        %1808 = vmatprep.subr.mxu0 0.0
        %1809 = vmatpush2.msra.mxu0 0.0
        %1810 = vmatprep.subr.mxu0 0.0
        %1811 = vmatpush2.msra.mxu0 0.0
        %1812 = vmatprep.subr.mxu0 0.0
        %1813 = vmatpush2.msra.mxu0 0.0
        %1814 = vmatprep.subr.mxu0 0.0
        %1815 = vmatpush2.msra.mxu0 0.0
        %1816 = vmatprep.subr.mxu0 0.0
        %1817 = vmatpush2.msra.mxu0 0.0
        %1818 = vmatprep.subr.mxu0 0.0
        %1819 = vmatpush2.msra.mxu0 0.0
        %1820 = vmatprep.subr.mxu0 0.0
        %1821 = vmatpush2.msra.mxu0 0.0
        %1822 = vmatprep.subr.mxu0 0.0
        %1823 = vmatpush2.msra.mxu0 0.0
        %1824 = vmatprep.mubr.f32.mxu0 0.0
        %1825 = vmatmul.mubr.f32.gmra.mxu0 %v1758
        %v1826 = vpop.f32.mrf.mxu0
        %v1827 = vadd.f32 %v1735, %v1826
        %v1828 = vpop.f32.mrf.mxu0
        %1829 = vdwg.mxu0
        %1830 = vst [vmem:[%s287] sm:$0xff] %v1827
        %s1831 = sand.u32 %s142, 1
        %s1832 = scalar_lea.sflag [#allocation4], %s1831
        %s1833 = sand.u32 %s142, 1
        %s1834 = smul.addr %s1833, 8
        %s1835 = scalar_lea.vmem [#allocation10], %s1834
        // Predicated region
        $region57: #{tpu_custom_call.1} parent=39 // pred_check
          %p1836 = pneg %p152
        $region58: #{tpu_custom_call.1} parent=39 // pred_check_branch
          %1838 = sbr.rel (%p1836) target = $region60
        $region59: #{tpu_custom_call.1} parent=39 // pred_region
          %s1840 = ssub.s32 128, 128
          %1841 = vsyncadd %s1832, %s1840
          %s1842 = smul.addr %s24, 128
          %s1843 = scalar_lea.hbm %s5, %s1842
          %s1845 = sshll.u32 %s1835, 4
          %s1846 = int_to_ptr.vmem [resolvable:$true] %s1845
          %1848 = dma.vmem_to_hbm [thread:$0]  %s1846, 128, %s1843, %s1832
        $region60: #{tpu_custom_call.1} parent=39 // pred_fallthru
          _
      $region40: #{tpu_custom_call.1} parent=5 // pred_fallthru
        _
      %p1849 = scmp.le.s32.totalorder 2, %s19
      // Predicated region
      $region61: #{tpu_custom_call.1} parent=5 // pred_check
        %p1850 = pneg %p1849
      $region62: #{tpu_custom_call.1} parent=5 // pred_check_branch
        %1852 = sbr.rel (%p1850) target = $region64
      $region63: #{tpu_custom_call.1} parent=5 // pred_region
        %s1853 = ssub.s32 %s19, 2
        // Predicated region
        $region65: #{tpu_custom_call.1} parent=63 // pred_check
          %p1854 = pneg %p158
        $region66: #{tpu_custom_call.1} parent=63 // pred_check_branch
          %1856 = sbr.rel (%p1854) target = $region68
        $region67: #{tpu_custom_call.1} parent=63 // pred_region
          %s1857 = sand.u32 %s143, 1
          %s1858 = scalar_lea.sflag [#allocation4], %s1857
          %s1859 = sand.u32 %s143, 1
          %s1860 = smul.addr %s1859, 8
          %s1861 = scalar_lea.vmem [#allocation10], %s1860
          %1862 = dma.done %s1858, 128
        $region68: #{tpu_custom_call.1} parent=63 // pred_fallthru
          _
      $region64: #{tpu_custom_call.1} parent=5 // pred_fallthru
        _
    $region6: #{tpu_custom_call.1} parent=1 // loop_footer
      %s23 = sadd.s32 1, %s19
    $region7: #{tpu_custom_call.1} parent=1 // loop_footer_branch
      %18 = sbr.rel target = $region3
    $region8: #{tpu_custom_call.1} parent=1 // loop_exit
      _
    %1863 = vsyncpa [#allocation3], 1
    %s1864 = scalar_lea.sflag [#allocation3], 1
    %1865 = vsyncpa %s1864, 1
    %1866 = vsyncpa [#allocation6], 1
    %1867 = vsyncpa [#allocation9], 1
    %1868 = vsyncpa [#allocation4], 1
    %s1869 = scalar_lea.sflag [#allocation4], 1
    %1870 = vsyncpa %s1869, 1

</llo_original>
